<compile_context>
chip_gen: v7x
topology: tpu7x:2x2x1
jax: 0.10.0
libtpu: 0.0.40
codegen_flags: <defaults>
</compile_context>

<pallas_src>
import jax
import jax.numpy as jnp
from jax.experimental import pallas as pl
from jax.experimental.pallas import tpu as pltpu


def gaussian_encoder_kernel(x_ref, w1_ref, b1_ref, w2_ref, b2_ref,
                            w3_ref, b3_ref, out_ref):
    cdt = w1_ref.dtype
    # x arrives f32 (half the HBM traffic of a pre-cast bf16+f32 pair of
    # passes); the cast to the MXU input dtype is free VPU filler here.
    x = x_ref[...].astype(cdt)
    # fc1 + ReLU (f32 accumulate / f32 elementwise, bf16 MXU inputs)
    h = jnp.dot(x, w1_ref[...], preferred_element_type=jnp.float32) + b1_ref[...]
    h = jnp.maximum(h, 0.0).astype(cdt)
    # fc2 + ReLU
    h = jnp.dot(h, w2_ref[...], preferred_element_type=jnp.float32) + b2_ref[...]
    h = jnp.maximum(h, 0.0).astype(cdt)
    # fc3 fused: single matmul, single lane-dense (tile, 2*z_dim) store.
    out_ref[...] = (jnp.dot(h, w3_ref[...], preferred_element_type=jnp.float32)
                    + b3_ref[...])


def _round_up(n, m):
    return (n + m - 1) // m * m


# Conservative scoped-VMEM budget that works on v5e/v6e (128 MiB physical) and
# v7x (64 MiB per TensorCore), leaving headroom for compiler scratch.
_VMEM_BUDGET = 40 * 1024 * 1024


def _resident_bytes(input_dim, hidden_dim, two_z, w_itemsize):
    w = (input_dim * hidden_dim + hidden_dim * hidden_dim
         + hidden_dim * two_z) * w_itemsize
    b = (hidden_dim * 2 + two_z) * 4          # biases stay f32
    return w + b


def _pick_batch_tile(B, bytes_per_row, budget):
    """Largest batch tile whose per-step buffers fit the VMEM budget, while
    keeping a few grid steps for pipelining / megacore when B is large."""
    max_rows = max(8, budget // max(bytes_per_row, 1))
    tile = 8
    for tb in (8, 16, 32, 64, 128, 256, 512, 1024, 2048, 4096, 8192):
        if tb <= max_rows:
            tile = tb
    if B >= 8 * 128:
        # v7x: keep >= ~3-4 steps per TensorCore so x-tile DMAs hide behind
        # the previous step's matmuls.
        while tile > 128 and pl.cdiv(B, tile) < 8:
            tile //= 2
    return min(tile, _round_up(B, 8))


def prepare_params(params, compute_dtype=jnp.bfloat16):
    """One-time cast of the weight matrices to the MXU input dtype so repeat
    calls don't pay a per-call HBM cast pass over the weights.  Biases f32."""
    w1, b1, w2, b2, w3, b3 = params
    return (w1.astype(compute_dtype), b1.astype(jnp.float32),
            w2.astype(compute_dtype), b2.astype(jnp.float32),
            w3.astype(compute_dtype), b3.astype(jnp.float32))


def gaussian_encoder(x, params, *, batch_tile=None, compute_dtype=jnp.bfloat16):
    """mu, logvar = GaussianEncoder(x).

    params = (w1, b1, w2, b2, w3, b3); weights stored as (in, out) (i.e. the
    transpose of nn.Linear's (out, in)), biases as (1, out).  Weights may be
    pre-cast to `compute_dtype` via prepare_params (re-cast here is a no-op).
    """
    w1, b1, w2, b2, w3, b3 = params
    B, input_dim = x.shape
    hidden_dim = w1.shape[1]
    two_z = w3.shape[1]
    z_dim = two_z // 2

    # MXU-input weights (no-op if already prepared); biases stay f32.
    w1c = w1.astype(compute_dtype)
    w2c = w2.astype(compute_dtype)
    w3c = w3.astype(compute_dtype)
    b1f = b1.astype(jnp.float32)
    b2f = b2.astype(jnp.float32)
    b3f = b3.astype(jnp.float32)

    # ---- tile selection from a VMEM budget, pad batch to a tile multiple ----
    w_itemsize = jnp.dtype(compute_dtype).itemsize
    resident = _resident_bytes(input_dim, hidden_dim, two_z, w_itemsize)
    bytes_per_row = (2 * input_dim * 4        # x tile, f32, double-buffered
                     + 2 * two_z * 4          # output tile, f32, double-buffered
                     + 2 * hidden_dim * 4)    # h intermediates (f32 headroom)
    if batch_tile is None:
        batch_tile = _pick_batch_tile(
            B, bytes_per_row, max(_VMEM_BUDGET - resident, 1 << 20))
    batch_tile = _round_up(batch_tile, 8)
    B_pad = _round_up(B, batch_tile)
    xp = x if B_pad == B else jnp.pad(x, ((0, B_pad - B), (0, 0)))
    grid = (B_pad // batch_tile,)

    # ---- advisory cost estimate consistent with the real DMA traffic ----
    flops = 2 * B_pad * (input_dim * hidden_dim + hidden_dim * hidden_dim
                         + hidden_dim * two_z)
    bytes_accessed = (B_pad * input_dim * jnp.dtype(xp.dtype).itemsize  # x (f32)
                      + resident                                        # weights once
                      + B_pad * two_z * 4)                              # output
    vmem_limit = int(min(max(resident + batch_tile * bytes_per_row + (4 << 20),
                             32 << 20),
                         56 << 20))

    x_spec = pl.BlockSpec((batch_tile, input_dim), lambda i: (i, 0))
    out_spec = pl.BlockSpec((batch_tile, two_z), lambda i: (i, 0))

    def _build(single_buffer_weights):
        if single_buffer_weights:
            def resident_spec(shape):
                # Constant block index -> resident in VMEM across grid steps;
                # single-buffered so weights aren't doubled (v7x: 64 MiB VMEM).
                return pl.BlockSpec(shape, lambda i: (0, 0),
                                    pipeline_mode=pl.Buffered(1))
        else:
            def resident_spec(shape):
                return pl.BlockSpec(shape, lambda i: (0, 0))
        return pl.pallas_call(
            gaussian_encoder_kernel,
            out_shape=jax.ShapeDtypeStruct((B_pad, two_z), jnp.float32),
            grid=grid,
            in_specs=[x_spec,
                      resident_spec(w1c.shape), resident_spec(b1f.shape),
                      resident_spec(w2c.shape), resident_spec(b2f.shape),
                      resident_spec(w3c.shape), resident_spec(b3f.shape)],
            out_specs=out_spec,
            compiler_params=pltpu.CompilerParams(
                dimension_semantics=("parallel",),
                vmem_limit_bytes=vmem_limit),
            cost_estimate=pl.CostEstimate(flops=flops, transcendentals=0,
                                          bytes_accessed=bytes_accessed),
        )

    args = (xp, w1c, b1f, w2c, b2f, w3c, b3f)
    try:
        out = _build(True)(*args)
    except Exception:
        # pipeline_mode=pl.Buffered(1) not supported on this jax build; fall
        # back to default double-buffering (identical numerics, more VMEM).
        out = _build(False)(*args)

    # torch.chunk(h2, 2, dim=1)
    mu = out[:B, :z_dim]
    logvar = out[:B, z_dim:]
    return mu, logvar


def init_params(key, input_dim, z_dim, hidden_dim):
    """Deterministic synthetic init (PyTorch-Linear-like uniform fan-in)."""
    ks = jax.random.split(key, 6)

    def linear(kw, kb, fan_in, fan_out):
        bound = 1.0 / jnp.sqrt(fan_in)
        # store weight as (in, out) = W.T of nn.Linear's (out, in)
        w = jax.random.uniform(kw, (fan_in, fan_out), jnp.float32, -bound, bound)
        b = jax.random.uniform(kb, (1, fan_out), jnp.float32, -bound, bound)
        return w, b

    w1, b1 = linear(ks[0], ks[1], input_dim, hidden_dim)
    w2, b2 = linear(ks[2], ks[3], hidden_dim, hidden_dim)
    w3, b3 = linear(ks[4], ks[5], hidden_dim, z_dim * 2)
    return (w1, b1, w2, b2, w3, b3)


def reference(x, params):
    w1, b1, w2, b2, w3, b3 = params
    h1 = jax.nn.relu(x @ w1 + b1)
    h1 = jax.nn.relu(h1 @ w2 + b2)
    h2 = h1 @ w3 + b3
    z = w3.shape[1] // 2
    return h2[:, :z], h2[:, z:]


if __name__ == "__main__":
    # Small but representative shapes: B=256, input_dim=32, z_dim=8, hidden=32.
    B, input_dim, z_dim, hidden_dim = 256, 32, 8, 32
    key = jax.random.PRNGKey(0)
    k_x, k_p = jax.random.split(key)
    x = jax.random.normal(k_x, (B, input_dim), jnp.float32)
    params = init_params(k_p, input_dim, z_dim, hidden_dim)

    mu_ref, logvar_ref = reference(x, params)

    # f32 compute path: exact-semantics check, tight tolerance.
    mu32, lv32 = gaussian_encoder(x, params, compute_dtype=jnp.float32)
    jax.block_until_ready((mu32, lv32))
    assert jnp.allclose(mu32, mu_ref, atol=1e-5, rtol=1e-5)
    assert jnp.allclose(lv32, logvar_ref, atol=1e-5, rtol=1e-5)

    # bf16 MXU-input path with weights pre-cast once (intended production path).
    bf16_params = prepare_params(params, jnp.bfloat16)
    mu, logvar = gaussian_encoder(x, bf16_params)
    jax.block_until_ready((mu, logvar))
    assert jnp.allclose(mu, mu_ref, atol=5e-2, rtol=5e-2)
    assert jnp.allclose(logvar, logvar_ref, atol=5e-2, rtol=5e-2)

    # Ragged batch (exercises the pad-to-tile path), f32 for a tight check.
    x_odd = x[:100]
    mu_o, lv_o = gaussian_encoder(x_odd, params, compute_dtype=jnp.float32)
    jax.block_until_ready((mu_o, lv_o))
    assert jnp.allclose(mu_o, mu_ref[:100], atol=1e-5, rtol=1e-5)
    assert jnp.allclose(lv_o, logvar_ref[:100], atol=1e-5, rtol=1e-5)

    print("KERNEL_OK")
</pallas_src>

<mosaic_0001>
module attributes {stable_mosaic.version = 11 : i64} {
  func.func @gaussian_encoder_kernel(%arg0: i32, %arg1: memref<256x32xf32, #tpu.memory_space<vmem>>, %arg2: memref<32x32xf32, #tpu.memory_space<vmem>>, %arg3: memref<1x32xf32, #tpu.memory_space<vmem>>, %arg4: memref<32x32xf32, #tpu.memory_space<vmem>>, %arg5: memref<1x32xf32, #tpu.memory_space<vmem>>, %arg6: memref<32x16xf32, #tpu.memory_space<vmem>>, %arg7: memref<1x16xf32, #tpu.memory_space<vmem>>, %arg8: memref<256x16xf32, #tpu.memory_space<vmem>>) attributes {dimension_semantics = [#tpu.dimension_semantics<parallel>], iteration_bounds = array<i64: 1>, scalar_prefetch = 0 : i64, scratch_operands = 0 : i64, tpu.core_type = #tpu.core_type<tc>, window_params = [{transform_indices = @transform_0, window_bounds = array<i64: 256, 32>}, {pipeline_mode = #tpu.pipeline_mode<synchronous>, transform_indices = @transform_1, window_bounds = array<i64: 32, 32>}, {pipeline_mode = #tpu.pipeline_mode<synchronous>, transform_indices = @transform_2, window_bounds = array<i64: 1, 32>}, {pipeline_mode = #tpu.pipeline_mode<synchronous>, transform_indices = @transform_3, window_bounds = array<i64: 32, 32>}, {pipeline_mode = #tpu.pipeline_mode<synchronous>, transform_indices = @transform_4, window_bounds = array<i64: 1, 32>}, {pipeline_mode = #tpu.pipeline_mode<synchronous>, transform_indices = @transform_5, window_bounds = array<i64: 32, 16>}, {pipeline_mode = #tpu.pipeline_mode<synchronous>, transform_indices = @transform_6, window_bounds = array<i64: 1, 16>}, {transform_indices = @transform_7, window_bounds = array<i64: 256, 16>}]} {
    %c0 = arith.constant 0 : index
    %c0_0 = arith.constant 0 : index
    %0 = vector.load %arg1[%c0, %c0_0] : memref<256x32xf32, #tpu.memory_space<vmem>>, vector<256x32xf32>
    %c0_1 = arith.constant 0 : index
    %c0_2 = arith.constant 0 : index
    %1 = vector.load %arg2[%c0_1, %c0_2] : memref<32x32xf32, #tpu.memory_space<vmem>>, vector<32x32xf32>
    %cst = arith.constant dense<0.000000e+00> : vector<256x32xf32>
    %2 = tpu.matmul %0, %1, %cst {dimension_numbers = #tpu.dot_dimension_numbers<[1], [0], [0], [1], [0, 0, 1, 1], [], []>} : vector<256x32xf32>, vector<32x32xf32>, vector<256x32xf32> -> vector<256x32xf32>
    %c0_3 = arith.constant 0 : index
    %c0_4 = arith.constant 0 : index
    %3 = vector.load %arg3[%c0_3, %c0_4] : memref<1x32xf32, #tpu.memory_space<vmem>>, vector<1x32xf32>
    %4 = vector.broadcast %3 : vector<1x32xf32> to vector<256x32xf32>
    %5 = arith.addf %2, %4 : vector<256x32xf32>
    %cst_5 = arith.constant 0.000000e+00 : f32
    %6 = vector.broadcast %cst_5 : f32 to vector<256x32xf32>
    %7 = arith.maximumf %5, %6 : vector<256x32xf32>
    %c0_6 = arith.constant 0 : index
    %c0_7 = arith.constant 0 : index
    %8 = vector.load %arg4[%c0_6, %c0_7] : memref<32x32xf32, #tpu.memory_space<vmem>>, vector<32x32xf32>
    %cst_8 = arith.constant dense<0.000000e+00> : vector<256x32xf32>
    %9 = tpu.matmul %7, %8, %cst_8 {dimension_numbers = #tpu.dot_dimension_numbers<[1], [0], [0], [1], [0, 0, 1, 1], [], []>} : vector<256x32xf32>, vector<32x32xf32>, vector<256x32xf32> -> vector<256x32xf32>
    %c0_9 = arith.constant 0 : index
    %c0_10 = arith.constant 0 : index
    %10 = vector.load %arg5[%c0_9, %c0_10] : memref<1x32xf32, #tpu.memory_space<vmem>>, vector<1x32xf32>
    %11 = vector.broadcast %10 : vector<1x32xf32> to vector<256x32xf32>
    %12 = arith.addf %9, %11 : vector<256x32xf32>
    %cst_11 = arith.constant 0.000000e+00 : f32
    %13 = vector.broadcast %cst_11 : f32 to vector<256x32xf32>
    %14 = arith.maximumf %12, %13 : vector<256x32xf32>
    %c0_12 = arith.constant 0 : index
    %c0_13 = arith.constant 0 : index
    %15 = vector.load %arg6[%c0_12, %c0_13] : memref<32x16xf32, #tpu.memory_space<vmem>>, vector<32x16xf32>
    %cst_14 = arith.constant dense<0.000000e+00> : vector<256x16xf32>
    %16 = tpu.matmul %14, %15, %cst_14 {dimension_numbers = #tpu.dot_dimension_numbers<[1], [0], [0], [1], [0, 0, 1, 1], [], []>} : vector<256x32xf32>, vector<32x16xf32>, vector<256x16xf32> -> vector<256x16xf32>
    %c0_15 = arith.constant 0 : index
    %c0_16 = arith.constant 0 : index
    %17 = vector.load %arg7[%c0_15, %c0_16] : memref<1x16xf32, #tpu.memory_space<vmem>>, vector<1x16xf32>
    %18 = vector.broadcast %17 : vector<1x16xf32> to vector<256x16xf32>
    %19 = arith.addf %16, %18 : vector<256x16xf32>
    %c0_17 = arith.constant 0 : index
    %c0_18 = arith.constant 0 : index
    %20 = vector.load %arg8[%c0_17, %c0_18] : memref<256x16xf32, #tpu.memory_space<vmem>>, vector<256x16xf32>
    tpu.vector_store %arg8[%c0_17, %c0_18], %19 {strides = array<i32>} : memref<256x16xf32, #tpu.memory_space<vmem>>, vector<256x16xf32>,
    return
  }
  func.func @transform_0(%arg0: i32) -> (i32, i32) {
    %c0_i32 = arith.constant 0 : i32
    %c0_i32_0 = arith.constant 0 : i32
    return %arg0, %c0_i32 : i32, i32
  }
  func.func @transform_1(%arg0: i32) -> (i32, i32) {
    %c0_i32 = arith.constant 0 : i32
    %c0_i32_0 = arith.constant 0 : i32
    %c0_i32_1 = arith.constant 0 : i32
    return %c0_i32, %c0_i32_0 : i32, i32
  }
  func.func @transform_2(%arg0: i32) -> (i32, i32) {
    %c0_i32 = arith.constant 0 : i32
    %c0_i32_0 = arith.constant 0 : i32
    %c0_i32_1 = arith.constant 0 : i32
    return %c0_i32, %c0_i32_0 : i32, i32
  }
  func.func @transform_3(%arg0: i32) -> (i32, i32) {
    %c0_i32 = arith.constant 0 : i32
    %c0_i32_0 = arith.constant 0 : i32
    %c0_i32_1 = arith.constant 0 : i32
    return %c0_i32, %c0_i32_0 : i32, i32
  }
  func.func @transform_4(%arg0: i32) -> (i32, i32) {
    %c0_i32 = arith.constant 0 : i32
    %c0_i32_0 = arith.constant 0 : i32
    %c0_i32_1 = arith.constant 0 : i32
    return %c0_i32, %c0_i32_0 : i32, i32
  }
  func.func @transform_5(%arg0: i32) -> (i32, i32) {
    %c0_i32 = arith.constant 0 : i32
    %c0_i32_0 = arith.constant 0 : i32
    %c0_i32_1 = arith.constant 0 : i32
    return %c0_i32, %c0_i32_0 : i32, i32
  }
  func.func @transform_6(%arg0: i32) -> (i32, i32) {
    %c0_i32 = arith.constant 0 : i32
    %c0_i32_0 = arith.constant 0 : i32
    %c0_i32_1 = arith.constant 0 : i32
    return %c0_i32, %c0_i32_0 : i32, i32
  }
  func.func @transform_7(%arg0: i32) -> (i32, i32) {
    %c0_i32 = arith.constant 0 : i32
    %c0_i32_0 = arith.constant 0 : i32
    return %arg0, %c0_i32 : i32, i32
  }
}

module attributes {stable_mosaic.version = 11 : i64} {
  func.func @gaussian_encoder_kernel(%arg0: i32, %arg1: memref<256x32xf32, #tpu.memory_space<vmem>>, %arg2: memref<32x32xf32, #tpu.memory_space<vmem>>, %arg3: memref<1x32xf32, #tpu.memory_space<vmem>>, %arg4: memref<32x32xf32, #tpu.memory_space<vmem>>, %arg5: memref<1x32xf32, #tpu.memory_space<vmem>>, %arg6: memref<32x16xf32, #tpu.memory_space<vmem>>, %arg7: memref<1x16xf32, #tpu.memory_space<vmem>>, %arg8: memref<256x16xf32, #tpu.memory_space<vmem>>) attributes {dimension_semantics = [#tpu.dimension_semantics<parallel>], iteration_bounds = array<i64: 1>, scalar_prefetch = 0 : i64, scratch_operands = 0 : i64, tpu.core_type = #tpu.core_type<tc>, window_params = [{transform_indices = @transform_0, window_bounds = array<i64: 256, 32>}, {pipeline_mode = #tpu.pipeline_mode<synchronous>, transform_indices = @transform_1, window_bounds = array<i64: 32, 32>}, {pipeline_mode = #tpu.pipeline_mode<synchronous>, transform_indices = @transform_2, window_bounds = array<i64: 1, 32>}, {pipeline_mode = #tpu.pipeline_mode<synchronous>, transform_indices = @transform_3, window_bounds = array<i64: 32, 32>}, {pipeline_mode = #tpu.pipeline_mode<synchronous>, transform_indices = @transform_4, window_bounds = array<i64: 1, 32>}, {pipeline_mode = #tpu.pipeline_mode<synchronous>, transform_indices = @transform_5, window_bounds = array<i64: 32, 16>}, {pipeline_mode = #tpu.pipeline_mode<synchronous>, transform_indices = @transform_6, window_bounds = array<i64: 1, 16>}, {transform_indices = @transform_7, window_bounds = array<i64: 256, 16>}]} {
    %c0 = arith.constant 0 : index
    %c0_0 = arith.constant 0 : index
    %0 = vector.load %arg1[%c0, %c0_0] : memref<256x32xf32, #tpu.memory_space<vmem>>, vector<256x32xf32>
    %c0_1 = arith.constant 0 : index
    %c0_2 = arith.constant 0 : index
    %1 = vector.load %arg2[%c0_1, %c0_2] : memref<32x32xf32, #tpu.memory_space<vmem>>, vector<32x32xf32>
    %cst = arith.constant dense<0.000000e+00> : vector<256x32xf32>
    %2 = tpu.matmul %0, %1, %cst {dimension_numbers = #tpu.dot_dimension_numbers<[1], [0], [0], [1], [0, 0, 1, 1], [], []>} : vector<256x32xf32>, vector<32x32xf32>, vector<256x32xf32> -> vector<256x32xf32>
    %c0_3 = arith.constant 0 : index
    %c0_4 = arith.constant 0 : index
    %3 = vector.load %arg3[%c0_3, %c0_4] : memref<1x32xf32, #tpu.memory_space<vmem>>, vector<1x32xf32>
    %4 = vector.broadcast %3 : vector<1x32xf32> to vector<256x32xf32>
    %5 = arith.addf %2, %4 : vector<256x32xf32>
    %cst_5 = arith.constant 0.000000e+00 : f32
    %6 = vector.broadcast %cst_5 : f32 to vector<256x32xf32>
    %7 = arith.maximumf %5, %6 : vector<256x32xf32>
    %c0_6 = arith.constant 0 : index
    %c0_7 = arith.constant 0 : index
    %8 = vector.load %arg4[%c0_6, %c0_7] : memref<32x32xf32, #tpu.memory_space<vmem>>, vector<32x32xf32>
    %cst_8 = arith.constant dense<0.000000e+00> : vector<256x32xf32>
    %9 = tpu.matmul %7, %8, %cst_8 {dimension_numbers = #tpu.dot_dimension_numbers<[1], [0], [0], [1], [0, 0, 1, 1], [], []>} : vector<256x32xf32>, vector<32x32xf32>, vector<256x32xf32> -> vector<256x32xf32>
    %c0_9 = arith.constant 0 : index
    %c0_10 = arith.constant 0 : index
    %10 = vector.load %arg5[%c0_9, %c0_10] : memref<1x32xf32, #tpu.memory_space<vmem>>, vector<1x32xf32>
    %11 = vector.broadcast %10 : vector<1x32xf32> to vector<256x32xf32>
    %12 = arith.addf %9, %11 : vector<256x32xf32>
    %cst_11 = arith.constant 0.000000e+00 : f32
    %13 = vector.broadcast %cst_11 : f32 to vector<256x32xf32>
    %14 = arith.maximumf %12, %13 : vector<256x32xf32>
    %c0_12 = arith.constant 0 : index
    %c0_13 = arith.constant 0 : index
    %15 = vector.load %arg6[%c0_12, %c0_13] : memref<32x16xf32, #tpu.memory_space<vmem>>, vector<32x16xf32>
    %cst_14 = arith.constant dense<0.000000e+00> : vector<256x16xf32>
    %16 = tpu.matmul %14, %15, %cst_14 {dimension_numbers = #tpu.dot_dimension_numbers<[1], [0], [0], [1], [0, 0, 1, 1], [], []>} : vector<256x32xf32>, vector<32x16xf32>, vector<256x16xf32> -> vector<256x16xf32>
    %c0_15 = arith.constant 0 : index
    %c0_16 = arith.constant 0 : index
    %17 = vector.load %arg7[%c0_15, %c0_16] : memref<1x16xf32, #tpu.memory_space<vmem>>, vector<1x16xf32>
    %18 = vector.broadcast %17 : vector<1x16xf32> to vector<256x16xf32>
    %19 = arith.addf %16, %18 : vector<256x16xf32>
    %c0_17 = arith.constant 0 : index
    %c0_18 = arith.constant 0 : index
    %20 = vector.load %arg8[%c0_17, %c0_18] : memref<256x16xf32, #tpu.memory_space<vmem>>, vector<256x16xf32>
    tpu.vector_store %arg8[%c0_17, %c0_18], %19 {strides = array<i32>} : memref<256x16xf32, #tpu.memory_space<vmem>>, vector<256x16xf32>,
    return
  }
  func.func @transform_0(%arg0: i32) -> (i32, i32) {
    %c0_i32 = arith.constant 0 : i32
    %c0_i32_0 = arith.constant 0 : i32
    return %arg0, %c0_i32 : i32, i32
  }
  func.func @transform_1(%arg0: i32) -> (i32, i32) {
    %c0_i32 = arith.constant 0 : i32
    %c0_i32_0 = arith.constant 0 : i32
    %c0_i32_1 = arith.constant 0 : i32
    return %c0_i32, %c0_i32_0 : i32, i32
  }
  func.func @transform_2(%arg0: i32) -> (i32, i32) {
    %c0_i32 = arith.constant 0 : i32
    %c0_i32_0 = arith.constant 0 : i32
    %c0_i32_1 = arith.constant 0 : i32
    return %c0_i32, %c0_i32_0 : i32, i32
  }
  func.func @transform_3(%arg0: i32) -> (i32, i32) {
    %c0_i32 = arith.constant 0 : i32
    %c0_i32_0 = arith.constant 0 : i32
    %c0_i32_1 = arith.constant 0 : i32
    return %c0_i32, %c0_i32_0 : i32, i32
  }
  func.func @transform_4(%arg0: i32) -> (i32, i32) {
    %c0_i32 = arith.constant 0 : i32
    %c0_i32_0 = arith.constant 0 : i32
    %c0_i32_1 = arith.constant 0 : i32
    return %c0_i32, %c0_i32_0 : i32, i32
  }
  func.func @transform_5(%arg0: i32) -> (i32, i32) {
    %c0_i32 = arith.constant 0 : i32
    %c0_i32_0 = arith.constant 0 : i32
    %c0_i32_1 = arith.constant 0 : i32
    return %c0_i32, %c0_i32_0 : i32, i32
  }
  func.func @transform_6(%arg0: i32) -> (i32, i32) {
    %c0_i32 = arith.constant 0 : i32
    %c0_i32_0 = arith.constant 0 : i32
    %c0_i32_1 = arith.constant 0 : i32
    return %c0_i32, %c0_i32_0 : i32, i32
  }
  func.func @transform_7(%arg0: i32) -> (i32, i32) {
    %c0_i32 = arith.constant 0 : i32
    %c0_i32_0 = arith.constant 0 : i32
    return %arg0, %c0_i32 : i32, i32
  }
}

</mosaic_0001>

<llo_original>
// kernel: tpu_custom_call.1
$region0: #{tpu_custom_call.1}
  #allocation0 [shape = 'u32[]', space=smem, size = 0x4, offset = 0x4, fixed_abs, tag = 'smem constant byte address 0x4 - core index']
  #allocation1 [shape = 'u32[144,128]{1,0:T(1,128)}', space=vmem, size = 0x12000, scoped, tag = 'internal scratch']
  %s0 = inlined_call_operand.vmem [shape: f32[256,32], index: 0, kind: input, shape index: {}]
  %s1 = inlined_call_operand.vmem [shape: f32[32,32], index: 1, kind: input, shape index: {}]
  %s2 = inlined_call_operand.vmem [shape: f32[1,32], index: 2, kind: input, shape index: {}]
  %s3 = inlined_call_operand.vmem [shape: f32[32,32], index: 3, kind: input, shape index: {}]
  %s4 = inlined_call_operand.vmem [shape: f32[1,32], index: 4, kind: input, shape index: {}]
  %s5 = inlined_call_operand.vmem [shape: f32[32,16], index: 5, kind: input, shape index: {}]
  %s6 = inlined_call_operand.vmem [shape: f32[1,16], index: 6, kind: input, shape index: {}]
  %s7 = inlined_call_operand.vmem [shape: f32[256,16], index: 7, kind: output, shape index: {}]
  %s8 = sld [smem:[#allocation0]]
  $region38: #{tpu_custom_call.1} parent=0
    _
  %s10 = ssub.s32 1, %s8
  %s11 = scalar_select 0, %s10, %s8
  // Predicated region
  $region2: #{tpu_custom_call.1} parent=0 // pred_check
    _
  $region3: #{tpu_custom_call.1} parent=0 // pred_check_branch
    %13 = sbr.rel (0) target = $region5
  $region4: #{tpu_custom_call.1} parent=0 // pred_region
    _
  $region5: #{tpu_custom_call.1} parent=0 // pred_fallthru
    _
  // Predicated region
  $region6: #{tpu_custom_call.1} parent=0 // pred_check
    _
  $region7: #{tpu_custom_call.1} parent=0 // pred_check_branch
    %15 = sbr.rel (0) target = $region9
  $region8: #{tpu_custom_call.1} parent=0 // pred_region
    _
  $region9: #{tpu_custom_call.1} parent=0 // pred_fallthru
    _
  // Predicated region
  $region10: #{tpu_custom_call.1} parent=0 // pred_check
    _
  $region11: #{tpu_custom_call.1} parent=0 // pred_check_branch
    %17 = sbr.rel (0) target = $region13
  $region12: #{tpu_custom_call.1} parent=0 // pred_region
    _
  $region13: #{tpu_custom_call.1} parent=0 // pred_fallthru
    _
  // Predicated region
  $region14: #{tpu_custom_call.1} parent=0 // pred_check
    _
  $region15: #{tpu_custom_call.1} parent=0 // pred_check_branch
    %19 = sbr.rel (0) target = $region17
  $region16: #{tpu_custom_call.1} parent=0 // pred_region
    _
  $region17: #{tpu_custom_call.1} parent=0 // pred_fallthru
    _
  // Predicated region
  $region18: #{tpu_custom_call.1} parent=0 // pred_check
    _
  $region19: #{tpu_custom_call.1} parent=0 // pred_check_branch
    %21 = sbr.rel (0) target = $region21
  $region20: #{tpu_custom_call.1} parent=0 // pred_region
    _
  $region21: #{tpu_custom_call.1} parent=0 // pred_fallthru
    _
  // Predicated region
  $region22: #{tpu_custom_call.1} parent=0 // pred_check
    _
  $region23: #{tpu_custom_call.1} parent=0 // pred_check_branch
    %23 = sbr.rel (0) target = $region25
  $region24: #{tpu_custom_call.1} parent=0 // pred_region
    _
  $region25: #{tpu_custom_call.1} parent=0 // pred_fallthru
    _
  // Predicated region
  $region26: #{tpu_custom_call.1} parent=0 // pred_check
    _
  $region27: #{tpu_custom_call.1} parent=0 // pred_check_branch
    %25 = sbr.rel (0) target = $region29
  $region28: #{tpu_custom_call.1} parent=0 // pred_region
    _
  $region29: #{tpu_custom_call.1} parent=0 // pred_fallthru
    _
  %v26 = vld [vmem:[%s0] sm:$0xff]
  %v27 = vld [vmem:[%s0 + $0x8] sm:$0xff]
  %v28 = vld [vmem:[%s0 + $0x10] sm:$0xff]
  %v29 = vld [vmem:[%s0 + $0x18] sm:$0xff]
  %v30 = vld [vmem:[%s0 + $0x20] sm:$0xff]
  %v31 = vld [vmem:[%s0 + $0x28] sm:$0xff]
  %v32 = vld [vmem:[%s0 + $0x30] sm:$0xff]
  %v33 = vld [vmem:[%s0 + $0x38] sm:$0xff]
  %v34 = vld [vmem:[%s0 + $0x40] sm:$0xff]
  %v35 = vld [vmem:[%s0 + $0x48] sm:$0xff]
  %v36 = vld [vmem:[%s0 + $0x50] sm:$0xff]
  %v37 = vld [vmem:[%s0 + $0x58] sm:$0xff]
  %v38 = vld [vmem:[%s0 + $0x60] sm:$0xff]
  %v39 = vld [vmem:[%s0 + $0x68] sm:$0xff]
  %v40 = vld [vmem:[%s0 + $0x70] sm:$0xff]
  %v41 = vld [vmem:[%s0 + $0x78] sm:$0xff]
  %v42 = vld [vmem:[%s0 + $0x80] sm:$0xff]
  %v43 = vld [vmem:[%s0 + $0x88] sm:$0xff]
  %v44 = vld [vmem:[%s0 + $0x90] sm:$0xff]
  %v45 = vld [vmem:[%s0 + $0x98] sm:$0xff]
  %v46 = vld [vmem:[%s0 + $0xa0] sm:$0xff]
  %v47 = vld [vmem:[%s0 + $0xa8] sm:$0xff]
  %v48 = vld [vmem:[%s0 + $0xb0] sm:$0xff]
  %v49 = vld [vmem:[%s0 + $0xb8] sm:$0xff]
  %v50 = vld [vmem:[%s0 + $0xc0] sm:$0xff]
  %v51 = vld [vmem:[%s0 + $0xc8] sm:$0xff]
  %v52 = vld [vmem:[%s0 + $0xd0] sm:$0xff]
  %v53 = vld [vmem:[%s0 + $0xd8] sm:$0xff]
  %v54 = vld [vmem:[%s0 + $0xe0] sm:$0xff]
  %v55 = vld [vmem:[%s0 + $0xe8] sm:$0xff]
  %v56 = vld [vmem:[%s0 + $0xf0] sm:$0xff]
  %v57 = vld [vmem:[%s0 + $0xf8] sm:$0xff]
  %v58 = vld [vmem:[%s1] sm:$0xff]
  %v59 = vld [vmem:[%s1 + $0x8] sm:$0xff]
  %v60 = vld [vmem:[%s1 + $0x10] sm:$0xff]
  %v61 = vld [vmem:[%s1 + $0x18] sm:$0xff]
  %v62 = vld [vmem:[%s2] sm:$0x1]
  %v64 = vlaneseq
  %v65 = vshrl.u32 %v64, 7
  %v66 = vsub.s32 0, %v65
  %v67 = vrot.slane %v62, %v66
  %vm69 = vcmask 261120
  %v71 = vsel %vm69, %v26, 0
  %v74 = vsel %vm69, %v27, 0
  %v77 = vsel %vm69, %v28, 0
  %v80 = vsel %vm69, %v29, 0
  %v83 = vsel %vm69, %v30, 0
  %v86 = vsel %vm69, %v31, 0
  %v89 = vsel %vm69, %v32, 0
  %v92 = vsel %vm69, %v33, 0
  %v95 = vsel %vm69, %v34, 0
  %v98 = vsel %vm69, %v35, 0
  %v101 = vsel %vm69, %v36, 0
  %v104 = vsel %vm69, %v37, 0
  %v107 = vsel %vm69, %v38, 0
  %v110 = vsel %vm69, %v39, 0
  %v113 = vsel %vm69, %v40, 0
  %v116 = vsel %vm69, %v41, 0
  %v119 = vsel %vm69, %v42, 0
  %v122 = vsel %vm69, %v43, 0
  %v125 = vsel %vm69, %v44, 0
  %v128 = vsel %vm69, %v45, 0
  %v131 = vsel %vm69, %v46, 0
  %v134 = vsel %vm69, %v47, 0
  %v137 = vsel %vm69, %v48, 0
  %v140 = vsel %vm69, %v49, 0
  %v143 = vsel %vm69, %v50, 0
  %v146 = vsel %vm69, %v51, 0
  %v149 = vsel %vm69, %v52, 0
  %v152 = vsel %vm69, %v53, 0
  %v155 = vsel %vm69, %v54, 0
  %v158 = vsel %vm69, %v55, 0
  %v161 = vsel %vm69, %v56, 0
  %v164 = vsel %vm69, %v57, 0
  %166 = vmatprep.subr.mxu0 0.0
  %167 = vmatpush1.msra.mxu0 %v58
  %168 = vmatprep.subr.mxu0 0.0
  %169 = vmatpush1.msra.mxu0 %v59
  %170 = vmatprep.subr.mxu0 0.0
  %171 = vmatpush1.msra.mxu0 %v60
  %172 = vmatprep.subr.mxu0 0.0
  %173 = vmatpush1.msra.mxu0 %v61
  %174 = vmatprep.subr.mxu0 0.0
  %175 = vmatpush1.msra.mxu0 0.0
  %176 = vmatprep.subr.mxu0 0.0
  %177 = vmatpush1.msra.mxu0 0.0
  %178 = vmatprep.subr.mxu0 0.0
  %179 = vmatpush1.msra.mxu0 0.0
  %180 = vmatprep.subr.mxu0 0.0
  %181 = vmatpush1.msra.mxu0 0.0
  %182 = vmatprep.subr.mxu0 0.0
  %183 = vmatpush1.msra.mxu0 0.0
  %184 = vmatprep.subr.mxu0 0.0
  %185 = vmatpush1.msra.mxu0 0.0
  %186 = vmatprep.subr.mxu0 0.0
  %187 = vmatpush1.msra.mxu0 0.0
  %188 = vmatprep.subr.mxu0 0.0
  %189 = vmatpush1.msra.mxu0 0.0
  %190 = vmatprep.subr.mxu0 0.0
  %191 = vmatpush1.msra.mxu0 0.0
  %192 = vmatprep.subr.mxu0 0.0
  %193 = vmatpush1.msra.mxu0 0.0
  %194 = vmatprep.subr.mxu0 0.0
  %195 = vmatpush1.msra.mxu0 0.0
  %196 = vmatprep.subr.mxu0 0.0
  %197 = vmatpush1.msra.mxu0 0.0
  %198 = vmatprep.subr.mxu0 0.0
  %199 = vmatpush1.msra.mxu0 0.0
  %200 = vmatprep.subr.mxu0 0.0
  %201 = vmatpush1.msra.mxu0 0.0
  %202 = vmatprep.subr.mxu0 0.0
  %203 = vmatpush1.msra.mxu0 0.0
  %204 = vmatprep.subr.mxu0 0.0
  %205 = vmatpush1.msra.mxu0 0.0
  %206 = vmatprep.subr.mxu0 0.0
  %207 = vmatpush1.msra.mxu0 0.0
  %208 = vmatprep.subr.mxu0 0.0
  %209 = vmatpush1.msra.mxu0 0.0
  %210 = vmatprep.subr.mxu0 0.0
  %211 = vmatpush1.msra.mxu0 0.0
  %212 = vmatprep.subr.mxu0 0.0
  %213 = vmatpush1.msra.mxu0 0.0
  %214 = vmatprep.subr.mxu0 0.0
  %215 = vmatpush1.msra.mxu0 0.0
  %216 = vmatprep.subr.mxu0 0.0
  %217 = vmatpush1.msra.mxu0 0.0
  %218 = vmatprep.subr.mxu0 0.0
  %219 = vmatpush1.msra.mxu0 0.0
  %220 = vmatprep.subr.mxu0 0.0
  %221 = vmatpush1.msra.mxu0 0.0
  %222 = vmatprep.subr.mxu0 0.0
  %223 = vmatpush1.msra.mxu0 0.0
  %224 = vmatprep.subr.mxu0 0.0
  %225 = vmatpush1.msra.mxu0 0.0
  %226 = vmatprep.subr.mxu0 0.0
  %227 = vmatpush1.msra.mxu0 0.0
  %228 = vmatprep.subr.mxu0 0.0
  %229 = vmatpush1.msra.mxu0 0.0
  %230 = vmatprep.mubr.f32.mxu0 0.0
  %231 = vmatmul.mubr.f32.gmra.mrb[0].mxu0 %v71
  %v232 = vpop.f32.mrb[0].mxu0
  %v233 = vadd.f32 %v67, %v232
  %v234 = vpop.f32.mrb[0].mxu0
  %235 = vmatprep.mubr.f32.mxu0 0.0
  %236 = vmatmul.mubr.f32.gmra.mrb[0].mxu0 %v74
  %v237 = vpop.f32.mrb[0].mxu0
  %v238 = vadd.f32 %v67, %v237
  %v239 = vpop.f32.mrb[0].mxu0
  %240 = vmatprep.mubr.f32.mxu0 0.0
  %241 = vmatmul.mubr.f32.gmra.mrb[0].mxu0 %v77
  %v242 = vpop.f32.mrb[0].mxu0
  %v243 = vadd.f32 %v67, %v242
  %v244 = vpop.f32.mrb[0].mxu0
  %245 = vmatprep.mubr.f32.mxu0 0.0
  %246 = vmatmul.mubr.f32.gmra.mrb[0].mxu0 %v80
  %v247 = vpop.f32.mrb[0].mxu0
  %v248 = vadd.f32 %v67, %v247
  %v249 = vpop.f32.mrb[0].mxu0
  %250 = vmatprep.mubr.f32.mxu0 0.0
  %251 = vmatmul.mubr.f32.gmra.mrb[0].mxu0 %v83
  %v252 = vpop.f32.mrb[0].mxu0
  %v253 = vadd.f32 %v67, %v252
  %v254 = vpop.f32.mrb[0].mxu0
  %255 = vmatprep.mubr.f32.mxu0 0.0
  %256 = vmatmul.mubr.f32.gmra.mrb[0].mxu0 %v86
  %v257 = vpop.f32.mrb[0].mxu0
  %v258 = vadd.f32 %v67, %v257
  %v259 = vpop.f32.mrb[0].mxu0
  %260 = vmatprep.mubr.f32.mxu0 0.0
  %261 = vmatmul.mubr.f32.gmra.mrb[0].mxu0 %v89
  %v262 = vpop.f32.mrb[0].mxu0
  %v263 = vadd.f32 %v67, %v262
  %v264 = vpop.f32.mrb[0].mxu0
  %265 = vmatprep.mubr.f32.mxu0 0.0
  %266 = vmatmul.mubr.f32.gmra.mrb[0].mxu0 %v92
  %v267 = vpop.f32.mrb[0].mxu0
  %v268 = vadd.f32 %v67, %v267
  %v269 = vpop.f32.mrb[0].mxu0
  %270 = vmatprep.mubr.f32.mxu0 0.0
  %271 = vmatmul.mubr.f32.gmra.mrb[0].mxu0 %v95
  %v272 = vpop.f32.mrb[0].mxu0
  %v273 = vadd.f32 %v67, %v272
  %v274 = vpop.f32.mrb[0].mxu0
  %275 = vmatprep.mubr.f32.mxu0 0.0
  %276 = vmatmul.mubr.f32.gmra.mrb[0].mxu0 %v98
  %v277 = vpop.f32.mrb[0].mxu0
  %v278 = vadd.f32 %v67, %v277
  %v279 = vpop.f32.mrb[0].mxu0
  %280 = vmatprep.mubr.f32.mxu0 0.0
  %281 = vmatmul.mubr.f32.gmra.mrb[0].mxu0 %v101
  %v282 = vpop.f32.mrb[0].mxu0
  %v283 = vadd.f32 %v67, %v282
  %v284 = vpop.f32.mrb[0].mxu0
  %285 = vmatprep.mubr.f32.mxu0 0.0
  %286 = vmatmul.mubr.f32.gmra.mrb[0].mxu0 %v104
  %v287 = vpop.f32.mrb[0].mxu0
  %v288 = vadd.f32 %v67, %v287
  %v289 = vpop.f32.mrb[0].mxu0
  %290 = vmatprep.mubr.f32.mxu0 0.0
  %291 = vmatmul.mubr.f32.gmra.mrb[0].mxu0 %v107
  %v292 = vpop.f32.mrb[0].mxu0
  %v293 = vadd.f32 %v67, %v292
  %v294 = vpop.f32.mrb[0].mxu0
  %295 = vmatprep.mubr.f32.mxu0 0.0
  %296 = vmatmul.mubr.f32.gmra.mrb[0].mxu0 %v110
  %v297 = vpop.f32.mrb[0].mxu0
  %v298 = vadd.f32 %v67, %v297
  %v299 = vpop.f32.mrb[0].mxu0
  %300 = vmatprep.mubr.f32.mxu0 0.0
  %301 = vmatmul.mubr.f32.gmra.mrb[0].mxu0 %v113
  %v302 = vpop.f32.mrb[0].mxu0
  %v303 = vadd.f32 %v67, %v302
  %v304 = vpop.f32.mrb[0].mxu0
  %305 = vmatprep.mubr.f32.mxu0 0.0
  %306 = vmatmul.mubr.f32.gmra.mrb[0].mxu0 %v116
  %v307 = vpop.f32.mrb[0].mxu0
  %v308 = vadd.f32 %v67, %v307
  %v309 = vpop.f32.mrb[0].mxu0
  %310 = vmatprep.mubr.f32.mxu0 0.0
  %311 = vmatmul.mubr.f32.gmra.mrb[0].mxu0 %v119
  %v312 = vpop.f32.mrb[0].mxu0
  %v313 = vadd.f32 %v67, %v312
  %v314 = vpop.f32.mrb[0].mxu0
  %315 = vmatprep.mubr.f32.mxu0 0.0
  %316 = vmatmul.mubr.f32.gmra.mrb[0].mxu0 %v122
  %v317 = vpop.f32.mrb[0].mxu0
  %v318 = vadd.f32 %v67, %v317
  %v319 = vpop.f32.mrb[0].mxu0
  %320 = vmatprep.mubr.f32.mxu0 0.0
  %321 = vmatmul.mubr.f32.gmra.mrb[0].mxu0 %v125
  %v322 = vpop.f32.mrb[0].mxu0
  %v323 = vadd.f32 %v67, %v322
  %v324 = vpop.f32.mrb[0].mxu0
  %325 = vmatprep.mubr.f32.mxu0 0.0
  %326 = vmatmul.mubr.f32.gmra.mrb[0].mxu0 %v128
  %v327 = vpop.f32.mrb[0].mxu0
  %v328 = vadd.f32 %v67, %v327
  %v329 = vpop.f32.mrb[0].mxu0
  %330 = vmatprep.mubr.f32.mxu0 0.0
  %331 = vmatmul.mubr.f32.gmra.mrb[0].mxu0 %v131
  %v332 = vpop.f32.mrb[0].mxu0
  %v333 = vadd.f32 %v67, %v332
  %v334 = vpop.f32.mrb[0].mxu0
  %335 = vmatprep.mubr.f32.mxu0 0.0
  %336 = vmatmul.mubr.f32.gmra.mrb[0].mxu0 %v134
  %v337 = vpop.f32.mrb[0].mxu0
  %v338 = vadd.f32 %v67, %v337
  %v339 = vpop.f32.mrb[0].mxu0
  %340 = vmatprep.mubr.f32.mxu0 0.0
  %341 = vmatmul.mubr.f32.gmra.mrb[0].mxu0 %v137
  %v342 = vpop.f32.mrb[0].mxu0
  %v343 = vadd.f32 %v67, %v342
  %v344 = vpop.f32.mrb[0].mxu0
  %345 = vmatprep.mubr.f32.mxu0 0.0
  %346 = vmatmul.mubr.f32.gmra.mrb[0].mxu0 %v140
  %v347 = vpop.f32.mrb[0].mxu0
  %v348 = vadd.f32 %v67, %v347
  %v349 = vpop.f32.mrb[0].mxu0
  %350 = vmatprep.mubr.f32.mxu0 0.0
  %351 = vmatmul.mubr.f32.gmra.mrb[0].mxu0 %v143
  %v352 = vpop.f32.mrb[0].mxu0
  %v353 = vadd.f32 %v67, %v352
  %v354 = vpop.f32.mrb[0].mxu0
  %355 = vmatprep.mubr.f32.mxu0 0.0
  %356 = vmatmul.mubr.f32.gmra.mrb[0].mxu0 %v146
  %v357 = vpop.f32.mrb[0].mxu0
  %v358 = vadd.f32 %v67, %v357
  %v359 = vpop.f32.mrb[0].mxu0
  %360 = vmatprep.mubr.f32.mxu0 0.0
  %361 = vmatmul.mubr.f32.gmra.mrb[0].mxu0 %v149
  %v362 = vpop.f32.mrb[0].mxu0
  %v363 = vadd.f32 %v67, %v362
  %v364 = vpop.f32.mrb[0].mxu0
  %365 = vmatprep.mubr.f32.mxu0 0.0
  %366 = vmatmul.mubr.f32.gmra.mrb[0].mxu0 %v152
  %v367 = vpop.f32.mrb[0].mxu0
  %v368 = vadd.f32 %v67, %v367
  %v369 = vpop.f32.mrb[0].mxu0
  %370 = vmatprep.mubr.f32.mxu0 0.0
  %371 = vmatmul.mubr.f32.gmra.mrb[0].mxu0 %v155
  %v372 = vpop.f32.mrb[0].mxu0
  %v373 = vadd.f32 %v67, %v372
  %v374 = vpop.f32.mrb[0].mxu0
  %375 = vmatprep.mubr.f32.mxu0 0.0
  %376 = vmatmul.mubr.f32.gmra.mrb[0].mxu0 %v158
  %v377 = vpop.f32.mrb[0].mxu0
  %v378 = vadd.f32 %v67, %v377
  %v379 = vpop.f32.mrb[0].mxu0
  %380 = vmatprep.mubr.f32.mxu0 0.0
  %381 = vmatmul.mubr.f32.gmra.mrb[0].mxu0 %v161
  %v382 = vpop.f32.mrb[0].mxu0
  %v383 = vadd.f32 %v67, %v382
  %v384 = vpop.f32.mrb[0].mxu0
  %385 = vmatprep.mubr.f32.mxu0 0.0
  %386 = vmatmul.mubr.f32.gmra.mrb[0].mxu0 %v164
  %v387 = vpop.f32.mrb[0].mxu0
  %v388 = vadd.f32 %v67, %v387
  %v389 = vpop.f32.mrb[0].mxu0
  %390 = vdwg.mxu0
  %v391 = vmax.f32 %v233, 0.0
  %v392 = vmax.f32 %v238, 0.0
  %v393 = vmax.f32 %v243, 0.0
  %v394 = vmax.f32 %v248, 0.0
  %v395 = vmax.f32 %v253, 0.0
  %v396 = vmax.f32 %v258, 0.0
  %v397 = vmax.f32 %v263, 0.0
  %v398 = vmax.f32 %v268, 0.0
  %v399 = vmax.f32 %v273, 0.0
  %v400 = vmax.f32 %v278, 0.0
  %v401 = vmax.f32 %v283, 0.0
  %v402 = vmax.f32 %v288, 0.0
  %v403 = vmax.f32 %v293, 0.0
  %v404 = vmax.f32 %v298, 0.0
  %v405 = vmax.f32 %v303, 0.0
  %v406 = vmax.f32 %v308, 0.0
  %v407 = vmax.f32 %v313, 0.0
  %v408 = vmax.f32 %v318, 0.0
  %v409 = vmax.f32 %v323, 0.0
  %v410 = vmax.f32 %v328, 0.0
  %v411 = vmax.f32 %v333, 0.0
  %v412 = vmax.f32 %v338, 0.0
  %v413 = vmax.f32 %v343, 0.0
  %v414 = vmax.f32 %v348, 0.0
  %v415 = vmax.f32 %v353, 0.0
  %v416 = vmax.f32 %v358, 0.0
  %v417 = vmax.f32 %v363, 0.0
  %v418 = vmax.f32 %v368, 0.0
  %v419 = vmax.f32 %v373, 0.0
  %v420 = vmax.f32 %v378, 0.0
  %v421 = vmax.f32 %v383, 0.0
  %v422 = vmax.f32 %v388, 0.0
  %v423 = vld [vmem:[%s3] sm:$0xff]
  %v424 = vld [vmem:[%s3 + $0x8] sm:$0xff]
  %v425 = vld [vmem:[%s3 + $0x10] sm:$0xff]
  %v426 = vld [vmem:[%s3 + $0x18] sm:$0xff]
  %v427 = vld [vmem:[%s4] sm:$0x1]
  %v429 = vlaneseq
  %v430 = vshrl.u32 %v429, 7
  %v431 = vsub.s32 0, %v430
  %v432 = vrot.slane %v427, %v431
  %v435 = vsel %vm69, %v391, 0
  %v438 = vsel %vm69, %v392, 0
  %v441 = vsel %vm69, %v393, 0
  %v444 = vsel %vm69, %v394, 0
  %v447 = vsel %vm69, %v395, 0
  %v450 = vsel %vm69, %v396, 0
  %v453 = vsel %vm69, %v397, 0
  %v456 = vsel %vm69, %v398, 0
  %v459 = vsel %vm69, %v399, 0
  %v462 = vsel %vm69, %v400, 0
  %v465 = vsel %vm69, %v401, 0
  %v468 = vsel %vm69, %v402, 0
  %v471 = vsel %vm69, %v403, 0
  %v474 = vsel %vm69, %v404, 0
  %v477 = vsel %vm69, %v405, 0
  %v480 = vsel %vm69, %v406, 0
  %v483 = vsel %vm69, %v407, 0
  %v486 = vsel %vm69, %v408, 0
  %v489 = vsel %vm69, %v409, 0
  %v492 = vsel %vm69, %v410, 0
  %v495 = vsel %vm69, %v411, 0
  %v498 = vsel %vm69, %v412, 0
  %v501 = vsel %vm69, %v413, 0
  %v504 = vsel %vm69, %v414, 0
  %v507 = vsel %vm69, %v415, 0
  %v510 = vsel %vm69, %v416, 0
  %v513 = vsel %vm69, %v417, 0
  %v516 = vsel %vm69, %v418, 0
  %v519 = vsel %vm69, %v419, 0
  %v522 = vsel %vm69, %v420, 0
  %v525 = vsel %vm69, %v421, 0
  %v528 = vsel %vm69, %v422, 0
  %530 = vmatprep.subr.mxu0 0.0
  %531 = vmatpush1.msra.mxu0 %v423
  %532 = vmatprep.subr.mxu0 0.0
  %533 = vmatpush1.msra.mxu0 %v424
  %534 = vmatprep.subr.mxu0 0.0
  %535 = vmatpush1.msra.mxu0 %v425
  %536 = vmatprep.subr.mxu0 0.0
  %537 = vmatpush1.msra.mxu0 %v426
  %538 = vmatprep.subr.mxu0 0.0
  %539 = vmatpush1.msra.mxu0 0.0
  %540 = vmatprep.subr.mxu0 0.0
  %541 = vmatpush1.msra.mxu0 0.0
  %542 = vmatprep.subr.mxu0 0.0
  %543 = vmatpush1.msra.mxu0 0.0
  %544 = vmatprep.subr.mxu0 0.0
  %545 = vmatpush1.msra.mxu0 0.0
  %546 = vmatprep.subr.mxu0 0.0
  %547 = vmatpush1.msra.mxu0 0.0
  %548 = vmatprep.subr.mxu0 0.0
  %549 = vmatpush1.msra.mxu0 0.0
  %550 = vmatprep.subr.mxu0 0.0
  %551 = vmatpush1.msra.mxu0 0.0
  %552 = vmatprep.subr.mxu0 0.0
  %553 = vmatpush1.msra.mxu0 0.0
  %554 = vmatprep.subr.mxu0 0.0
  %555 = vmatpush1.msra.mxu0 0.0
  %556 = vmatprep.subr.mxu0 0.0
  %557 = vmatpush1.msra.mxu0 0.0
  %558 = vmatprep.subr.mxu0 0.0
  %559 = vmatpush1.msra.mxu0 0.0
  %560 = vmatprep.subr.mxu0 0.0
  %561 = vmatpush1.msra.mxu0 0.0
  %562 = vmatprep.subr.mxu0 0.0
  %563 = vmatpush1.msra.mxu0 0.0
  %564 = vmatprep.subr.mxu0 0.0
  %565 = vmatpush1.msra.mxu0 0.0
  %566 = vmatprep.subr.mxu0 0.0
  %567 = vmatpush1.msra.mxu0 0.0
  %568 = vmatprep.subr.mxu0 0.0
  %569 = vmatpush1.msra.mxu0 0.0
  %570 = vmatprep.subr.mxu0 0.0
  %571 = vmatpush1.msra.mxu0 0.0
  %572 = vmatprep.subr.mxu0 0.0
  %573 = vmatpush1.msra.mxu0 0.0
  %574 = vmatprep.subr.mxu0 0.0
  %575 = vmatpush1.msra.mxu0 0.0
  %576 = vmatprep.subr.mxu0 0.0
  %577 = vmatpush1.msra.mxu0 0.0
  %578 = vmatprep.subr.mxu0 0.0
  %579 = vmatpush1.msra.mxu0 0.0
  %580 = vmatprep.subr.mxu0 0.0
  %581 = vmatpush1.msra.mxu0 0.0
  %582 = vmatprep.subr.mxu0 0.0
  %583 = vmatpush1.msra.mxu0 0.0
  %584 = vmatprep.subr.mxu0 0.0
  %585 = vmatpush1.msra.mxu0 0.0
  %586 = vmatprep.subr.mxu0 0.0
  %587 = vmatpush1.msra.mxu0 0.0
  %588 = vmatprep.subr.mxu0 0.0
  %589 = vmatpush1.msra.mxu0 0.0
  %590 = vmatprep.subr.mxu0 0.0
  %591 = vmatpush1.msra.mxu0 0.0
  %592 = vmatprep.subr.mxu0 0.0
  %593 = vmatpush1.msra.mxu0 0.0
  %594 = vmatprep.mubr.f32.mxu0 0.0
  %595 = vmatmul.mubr.f32.gmra.mrb[0].mxu0 %v435
  %v596 = vpop.f32.mrb[0].mxu0
  %v597 = vadd.f32 %v432, %v596
  %v598 = vpop.f32.mrb[0].mxu0
  %599 = vmatprep.mubr.f32.mxu0 0.0
  %600 = vmatmul.mubr.f32.gmra.mrb[0].mxu0 %v438
  %v601 = vpop.f32.mrb[0].mxu0
  %v602 = vadd.f32 %v432, %v601
  %v603 = vpop.f32.mrb[0].mxu0
  %604 = vmatprep.mubr.f32.mxu0 0.0
  %605 = vmatmul.mubr.f32.gmra.mrb[0].mxu0 %v441
  %v606 = vpop.f32.mrb[0].mxu0
  %v607 = vadd.f32 %v432, %v606
  %v608 = vpop.f32.mrb[0].mxu0
  %609 = vmatprep.mubr.f32.mxu0 0.0
  %610 = vmatmul.mubr.f32.gmra.mrb[0].mxu0 %v444
  %v611 = vpop.f32.mrb[0].mxu0
  %v612 = vadd.f32 %v432, %v611
  %v613 = vpop.f32.mrb[0].mxu0
  %614 = vmatprep.mubr.f32.mxu0 0.0
  %615 = vmatmul.mubr.f32.gmra.mrb[0].mxu0 %v447
  %v616 = vpop.f32.mrb[0].mxu0
  %v617 = vadd.f32 %v432, %v616
  %v618 = vpop.f32.mrb[0].mxu0
  %619 = vmatprep.mubr.f32.mxu0 0.0
  %620 = vmatmul.mubr.f32.gmra.mrb[0].mxu0 %v450
  %v621 = vpop.f32.mrb[0].mxu0
  %v622 = vadd.f32 %v432, %v621
  %v623 = vpop.f32.mrb[0].mxu0
  %624 = vmatprep.mubr.f32.mxu0 0.0
  %625 = vmatmul.mubr.f32.gmra.mrb[0].mxu0 %v453
  %v626 = vpop.f32.mrb[0].mxu0
  %v627 = vadd.f32 %v432, %v626
  %v628 = vpop.f32.mrb[0].mxu0
  %629 = vmatprep.mubr.f32.mxu0 0.0
  %630 = vmatmul.mubr.f32.gmra.mrb[0].mxu0 %v456
  %v631 = vpop.f32.mrb[0].mxu0
  %v632 = vadd.f32 %v432, %v631
  %v633 = vpop.f32.mrb[0].mxu0
  %634 = vmatprep.mubr.f32.mxu0 0.0
  %635 = vmatmul.mubr.f32.gmra.mrb[0].mxu0 %v459
  %v636 = vpop.f32.mrb[0].mxu0
  %v637 = vadd.f32 %v432, %v636
  %v638 = vpop.f32.mrb[0].mxu0
  %639 = vmatprep.mubr.f32.mxu0 0.0
  %640 = vmatmul.mubr.f32.gmra.mrb[0].mxu0 %v462
  %v641 = vpop.f32.mrb[0].mxu0
  %v642 = vadd.f32 %v432, %v641
  %v643 = vpop.f32.mrb[0].mxu0
  %644 = vmatprep.mubr.f32.mxu0 0.0
  %645 = vmatmul.mubr.f32.gmra.mrb[0].mxu0 %v465
  %v646 = vpop.f32.mrb[0].mxu0
  %v647 = vadd.f32 %v432, %v646
  %v648 = vpop.f32.mrb[0].mxu0
  %649 = vmatprep.mubr.f32.mxu0 0.0
  %650 = vmatmul.mubr.f32.gmra.mrb[0].mxu0 %v468
  %v651 = vpop.f32.mrb[0].mxu0
  %v652 = vadd.f32 %v432, %v651
  %v653 = vpop.f32.mrb[0].mxu0
  %654 = vmatprep.mubr.f32.mxu0 0.0
  %655 = vmatmul.mubr.f32.gmra.mrb[0].mxu0 %v471
  %v656 = vpop.f32.mrb[0].mxu0
  %v657 = vadd.f32 %v432, %v656
  %v658 = vpop.f32.mrb[0].mxu0
  %659 = vmatprep.mubr.f32.mxu0 0.0
  %660 = vmatmul.mubr.f32.gmra.mrb[0].mxu0 %v474
  %v661 = vpop.f32.mrb[0].mxu0
  %v662 = vadd.f32 %v432, %v661
  %v663 = vpop.f32.mrb[0].mxu0
  %664 = vmatprep.mubr.f32.mxu0 0.0
  %665 = vmatmul.mubr.f32.gmra.mrb[0].mxu0 %v477
  %v666 = vpop.f32.mrb[0].mxu0
  %v667 = vadd.f32 %v432, %v666
  %v668 = vpop.f32.mrb[0].mxu0
  %669 = vmatprep.mubr.f32.mxu0 0.0
  %670 = vmatmul.mubr.f32.gmra.mrb[0].mxu0 %v480
  %v671 = vpop.f32.mrb[0].mxu0
  %v672 = vadd.f32 %v432, %v671
  %v673 = vpop.f32.mrb[0].mxu0
  %674 = vmatprep.mubr.f32.mxu0 0.0
  %675 = vmatmul.mubr.f32.gmra.mrb[0].mxu0 %v483
  %v676 = vpop.f32.mrb[0].mxu0
  %v677 = vadd.f32 %v432, %v676
  %v678 = vpop.f32.mrb[0].mxu0
  %679 = vmatprep.mubr.f32.mxu0 0.0
  %680 = vmatmul.mubr.f32.gmra.mrb[0].mxu0 %v486
  %v681 = vpop.f32.mrb[0].mxu0
  %v682 = vadd.f32 %v432, %v681
  %v683 = vpop.f32.mrb[0].mxu0
  %684 = vmatprep.mubr.f32.mxu0 0.0
  %685 = vmatmul.mubr.f32.gmra.mrb[0].mxu0 %v489
  %v686 = vpop.f32.mrb[0].mxu0
  %v687 = vadd.f32 %v432, %v686
  %v688 = vpop.f32.mrb[0].mxu0
  %689 = vmatprep.mubr.f32.mxu0 0.0
  %690 = vmatmul.mubr.f32.gmra.mrb[0].mxu0 %v492
  %v691 = vpop.f32.mrb[0].mxu0
  %v692 = vadd.f32 %v432, %v691
  %v693 = vpop.f32.mrb[0].mxu0
  %694 = vmatprep.mubr.f32.mxu0 0.0
  %695 = vmatmul.mubr.f32.gmra.mrb[0].mxu0 %v495
  %v696 = vpop.f32.mrb[0].mxu0
  %v697 = vadd.f32 %v432, %v696
  %v698 = vpop.f32.mrb[0].mxu0
  %699 = vmatprep.mubr.f32.mxu0 0.0
  %700 = vmatmul.mubr.f32.gmra.mrb[0].mxu0 %v498
  %v701 = vpop.f32.mrb[0].mxu0
  %v702 = vadd.f32 %v432, %v701
  %v703 = vpop.f32.mrb[0].mxu0
  %704 = vmatprep.mubr.f32.mxu0 0.0
  %705 = vmatmul.mubr.f32.gmra.mrb[0].mxu0 %v501
  %v706 = vpop.f32.mrb[0].mxu0
  %v707 = vadd.f32 %v432, %v706
  %v708 = vpop.f32.mrb[0].mxu0
  %709 = vmatprep.mubr.f32.mxu0 0.0
  %710 = vmatmul.mubr.f32.gmra.mrb[0].mxu0 %v504
  %v711 = vpop.f32.mrb[0].mxu0
  %v712 = vadd.f32 %v432, %v711
  %v713 = vpop.f32.mrb[0].mxu0
  %714 = vmatprep.mubr.f32.mxu0 0.0
  %715 = vmatmul.mubr.f32.gmra.mrb[0].mxu0 %v507
  %v716 = vpop.f32.mrb[0].mxu0
  %v717 = vadd.f32 %v432, %v716
  %v718 = vpop.f32.mrb[0].mxu0
  %719 = vmatprep.mubr.f32.mxu0 0.0
  %720 = vmatmul.mubr.f32.gmra.mrb[0].mxu0 %v510
  %v721 = vpop.f32.mrb[0].mxu0
  %v722 = vadd.f32 %v432, %v721
  %v723 = vpop.f32.mrb[0].mxu0
  %724 = vmatprep.mubr.f32.mxu0 0.0
  %725 = vmatmul.mubr.f32.gmra.mrb[0].mxu0 %v513
  %v726 = vpop.f32.mrb[0].mxu0
  %v727 = vadd.f32 %v432, %v726
  %v728 = vpop.f32.mrb[0].mxu0
  %729 = vmatprep.mubr.f32.mxu0 0.0
  %730 = vmatmul.mubr.f32.gmra.mrb[0].mxu0 %v516
  %v731 = vpop.f32.mrb[0].mxu0
  %v732 = vadd.f32 %v432, %v731
  %v733 = vpop.f32.mrb[0].mxu0
  %734 = vmatprep.mubr.f32.mxu0 0.0
  %735 = vmatmul.mubr.f32.gmra.mrb[0].mxu0 %v519
  %v736 = vpop.f32.mrb[0].mxu0
  %v737 = vadd.f32 %v432, %v736
  %v738 = vpop.f32.mrb[0].mxu0
  %739 = vmatprep.mubr.f32.mxu0 0.0
  %740 = vmatmul.mubr.f32.gmra.mrb[0].mxu0 %v522
  %v741 = vpop.f32.mrb[0].mxu0
  %v742 = vadd.f32 %v432, %v741
  %v743 = vpop.f32.mrb[0].mxu0
  %744 = vmatprep.mubr.f32.mxu0 0.0
  %745 = vmatmul.mubr.f32.gmra.mrb[0].mxu0 %v525
  %v746 = vpop.f32.mrb[0].mxu0
  %v747 = vadd.f32 %v432, %v746
  %v748 = vpop.f32.mrb[0].mxu0
  %749 = vmatprep.mubr.f32.mxu0 0.0
  %750 = vmatmul.mubr.f32.gmra.mrb[0].mxu0 %v528
  %v751 = vpop.f32.mrb[0].mxu0
  %v752 = vadd.f32 %v432, %v751
  %v753 = vpop.f32.mrb[0].mxu0
  %754 = vdwg.mxu0
  %v755 = vmax.f32 %v597, 0.0
  %v756 = vmax.f32 %v602, 0.0
  %v757 = vmax.f32 %v607, 0.0
  %v758 = vmax.f32 %v612, 0.0
  %v759 = vmax.f32 %v617, 0.0
  %v760 = vmax.f32 %v622, 0.0
  %v761 = vmax.f32 %v627, 0.0
  %v762 = vmax.f32 %v632, 0.0
  %v763 = vmax.f32 %v637, 0.0
  %v764 = vmax.f32 %v642, 0.0
  %v765 = vmax.f32 %v647, 0.0
  %v766 = vmax.f32 %v652, 0.0
  %v767 = vmax.f32 %v657, 0.0
  %v768 = vmax.f32 %v662, 0.0
  %v769 = vmax.f32 %v667, 0.0
  %v770 = vmax.f32 %v672, 0.0
  %v771 = vmax.f32 %v677, 0.0
  %v772 = vmax.f32 %v682, 0.0
  %v773 = vmax.f32 %v687, 0.0
  %v774 = vmax.f32 %v692, 0.0
  %v775 = vmax.f32 %v697, 0.0
  %v776 = vmax.f32 %v702, 0.0
  %v777 = vmax.f32 %v707, 0.0
  %v778 = vmax.f32 %v712, 0.0
  %v779 = vmax.f32 %v717, 0.0
  %v780 = vmax.f32 %v722, 0.0
  %v781 = vmax.f32 %v727, 0.0
  %v782 = vmax.f32 %v732, 0.0
  %v783 = vmax.f32 %v737, 0.0
  %v784 = vmax.f32 %v742, 0.0
  %v785 = vmax.f32 %v747, 0.0
  %v786 = vmax.f32 %v752, 0.0
  %v787 = vld [vmem:[%s5] sm:$0xff]
  %v788 = vld [vmem:[%s5 + $0x8] sm:$0xff]
  %v789 = vld [vmem:[%s5 + $0x10] sm:$0xff]
  %v790 = vld [vmem:[%s5 + $0x18] sm:$0xff]
  %v791 = vld [vmem:[%s6] sm:$0x1]
  %v793 = vlaneseq
  %v794 = vshrl.u32 %v793, 7
  %v795 = vsub.s32 0, %v794
  %v796 = vrot.slane %v791, %v795
  %v799 = vsel %vm69, %v755, 0
  %v802 = vsel %vm69, %v756, 0
  %v805 = vsel %vm69, %v757, 0
  %v808 = vsel %vm69, %v758, 0
  %v811 = vsel %vm69, %v759, 0
  %v814 = vsel %vm69, %v760, 0
  %v817 = vsel %vm69, %v761, 0
  %v820 = vsel %vm69, %v762, 0
  %v823 = vsel %vm69, %v763, 0
  %v826 = vsel %vm69, %v764, 0
  %v829 = vsel %vm69, %v765, 0
  %v832 = vsel %vm69, %v766, 0
  %v835 = vsel %vm69, %v767, 0
  %v838 = vsel %vm69, %v768, 0
  %v841 = vsel %vm69, %v769, 0
  %v844 = vsel %vm69, %v770, 0
  %v847 = vsel %vm69, %v771, 0
  %v850 = vsel %vm69, %v772, 0
  %v853 = vsel %vm69, %v773, 0
  %v856 = vsel %vm69, %v774, 0
  %v859 = vsel %vm69, %v775, 0
  %v862 = vsel %vm69, %v776, 0
  %v865 = vsel %vm69, %v777, 0
  %v868 = vsel %vm69, %v778, 0
  %v871 = vsel %vm69, %v779, 0
  %v874 = vsel %vm69, %v780, 0
  %v877 = vsel %vm69, %v781, 0
  %v880 = vsel %vm69, %v782, 0
  %v883 = vsel %vm69, %v783, 0
  %v886 = vsel %vm69, %v784, 0
  %v889 = vsel %vm69, %v785, 0
  %v892 = vsel %vm69, %v786, 0
  %894 = vmatprep.subr.mxu0 0.0
  %895 = vmatpush1.msra.mxu0 %v787
  %896 = vmatprep.subr.mxu0 0.0
  %897 = vmatpush1.msra.mxu0 %v788
  %898 = vmatprep.subr.mxu0 0.0
  %899 = vmatpush1.msra.mxu0 %v789
  %900 = vmatprep.subr.mxu0 0.0
  %901 = vmatpush1.msra.mxu0 %v790
  %902 = vmatprep.subr.mxu0 0.0
  %903 = vmatpush1.msra.mxu0 0.0
  %904 = vmatprep.subr.mxu0 0.0
  %905 = vmatpush1.msra.mxu0 0.0
  %906 = vmatprep.subr.mxu0 0.0
  %907 = vmatpush1.msra.mxu0 0.0
  %908 = vmatprep.subr.mxu0 0.0
  %909 = vmatpush1.msra.mxu0 0.0
  %910 = vmatprep.subr.mxu0 0.0
  %911 = vmatpush1.msra.mxu0 0.0
  %912 = vmatprep.subr.mxu0 0.0
  %913 = vmatpush1.msra.mxu0 0.0
  %914 = vmatprep.subr.mxu0 0.0
  %915 = vmatpush1.msra.mxu0 0.0
  %916 = vmatprep.subr.mxu0 0.0
  %917 = vmatpush1.msra.mxu0 0.0
  %918 = vmatprep.subr.mxu0 0.0
  %919 = vmatpush1.msra.mxu0 0.0
  %920 = vmatprep.subr.mxu0 0.0
  %921 = vmatpush1.msra.mxu0 0.0
  %922 = vmatprep.subr.mxu0 0.0
  %923 = vmatpush1.msra.mxu0 0.0
  %924 = vmatprep.subr.mxu0 0.0
  %925 = vmatpush1.msra.mxu0 0.0
  %926 = vmatprep.subr.mxu0 0.0
  %927 = vmatpush1.msra.mxu0 0.0
  %928 = vmatprep.subr.mxu0 0.0
  %929 = vmatpush1.msra.mxu0 0.0
  %930 = vmatprep.subr.mxu0 0.0
  %931 = vmatpush1.msra.mxu0 0.0
  %932 = vmatprep.subr.mxu0 0.0
  %933 = vmatpush1.msra.mxu0 0.0
  %934 = vmatprep.subr.mxu0 0.0
  %935 = vmatpush1.msra.mxu0 0.0
  %936 = vmatprep.subr.mxu0 0.0
  %937 = vmatpush1.msra.mxu0 0.0
  %938 = vmatprep.subr.mxu0 0.0
  %939 = vmatpush1.msra.mxu0 0.0
  %940 = vmatprep.subr.mxu0 0.0
  %941 = vmatpush1.msra.mxu0 0.0
  %942 = vmatprep.subr.mxu0 0.0
  %943 = vmatpush1.msra.mxu0 0.0
  %944 = vmatprep.subr.mxu0 0.0
  %945 = vmatpush1.msra.mxu0 0.0
  %946 = vmatprep.subr.mxu0 0.0
  %947 = vmatpush1.msra.mxu0 0.0
  %948 = vmatprep.subr.mxu0 0.0
  %949 = vmatpush1.msra.mxu0 0.0
  %950 = vmatprep.subr.mxu0 0.0
  %951 = vmatpush1.msra.mxu0 0.0
  %952 = vmatprep.subr.mxu0 0.0
  %953 = vmatpush1.msra.mxu0 0.0
  %954 = vmatprep.subr.mxu0 0.0
  %955 = vmatpush1.msra.mxu0 0.0
  %956 = vmatprep.subr.mxu0 0.0
  %957 = vmatpush1.msra.mxu0 0.0
  %958 = vmatprep.mubr.f32.mxu0 0.0
  %959 = vmatmul.mubr.f32.gmra.mrb[0].mxu0 %v799
  %v960 = vpop.f32.mrb[0].mxu0
  %v961 = vadd.f32 %v796, %v960
  %v962 = vpop.f32.mrb[0].mxu0
  %963 = vmatprep.mubr.f32.mxu0 0.0
  %964 = vmatmul.mubr.f32.gmra.mrb[0].mxu0 %v802
  %v965 = vpop.f32.mrb[0].mxu0
  %v966 = vadd.f32 %v796, %v965
  %v967 = vpop.f32.mrb[0].mxu0
  %968 = vmatprep.mubr.f32.mxu0 0.0
  %969 = vmatmul.mubr.f32.gmra.mrb[0].mxu0 %v805
  %v970 = vpop.f32.mrb[0].mxu0
  %v971 = vadd.f32 %v796, %v970
  %v972 = vpop.f32.mrb[0].mxu0
  %973 = vmatprep.mubr.f32.mxu0 0.0
  %974 = vmatmul.mubr.f32.gmra.mrb[0].mxu0 %v808
  %v975 = vpop.f32.mrb[0].mxu0
  %v976 = vadd.f32 %v796, %v975
  %v977 = vpop.f32.mrb[0].mxu0
  %978 = vmatprep.mubr.f32.mxu0 0.0
  %979 = vmatmul.mubr.f32.gmra.mrb[0].mxu0 %v811
  %v980 = vpop.f32.mrb[0].mxu0
  %v981 = vadd.f32 %v796, %v980
  %v982 = vpop.f32.mrb[0].mxu0
  %983 = vmatprep.mubr.f32.mxu0 0.0
  %984 = vmatmul.mubr.f32.gmra.mrb[0].mxu0 %v814
  %v985 = vpop.f32.mrb[0].mxu0
  %v986 = vadd.f32 %v796, %v985
  %v987 = vpop.f32.mrb[0].mxu0
  %988 = vmatprep.mubr.f32.mxu0 0.0
  %989 = vmatmul.mubr.f32.gmra.mrb[0].mxu0 %v817
  %v990 = vpop.f32.mrb[0].mxu0
  %v991 = vadd.f32 %v796, %v990
  %v992 = vpop.f32.mrb[0].mxu0
  %993 = vmatprep.mubr.f32.mxu0 0.0
  %994 = vmatmul.mubr.f32.gmra.mrb[0].mxu0 %v820
  %v995 = vpop.f32.mrb[0].mxu0
  %v996 = vadd.f32 %v796, %v995
  %v997 = vpop.f32.mrb[0].mxu0
  %998 = vmatprep.mubr.f32.mxu0 0.0
  %999 = vmatmul.mubr.f32.gmra.mrb[0].mxu0 %v823
  %v1000 = vpop.f32.mrb[0].mxu0
  %v1001 = vadd.f32 %v796, %v1000
  %v1002 = vpop.f32.mrb[0].mxu0
  %1003 = vmatprep.mubr.f32.mxu0 0.0
  %1004 = vmatmul.mubr.f32.gmra.mrb[0].mxu0 %v826
  %v1005 = vpop.f32.mrb[0].mxu0
  %v1006 = vadd.f32 %v796, %v1005
  %v1007 = vpop.f32.mrb[0].mxu0
  %1008 = vmatprep.mubr.f32.mxu0 0.0
  %1009 = vmatmul.mubr.f32.gmra.mrb[0].mxu0 %v829
  %v1010 = vpop.f32.mrb[0].mxu0
  %v1011 = vadd.f32 %v796, %v1010
  %v1012 = vpop.f32.mrb[0].mxu0
  %1013 = vmatprep.mubr.f32.mxu0 0.0
  %1014 = vmatmul.mubr.f32.gmra.mrb[0].mxu0 %v832
  %v1015 = vpop.f32.mrb[0].mxu0
  %v1016 = vadd.f32 %v796, %v1015
  %v1017 = vpop.f32.mrb[0].mxu0
  %1018 = vmatprep.mubr.f32.mxu0 0.0
  %1019 = vmatmul.mubr.f32.gmra.mrb[0].mxu0 %v835
  %v1020 = vpop.f32.mrb[0].mxu0
  %v1021 = vadd.f32 %v796, %v1020
  %v1022 = vpop.f32.mrb[0].mxu0
  %1023 = vmatprep.mubr.f32.mxu0 0.0
  %1024 = vmatmul.mubr.f32.gmra.mrb[0].mxu0 %v838
  %v1025 = vpop.f32.mrb[0].mxu0
  %v1026 = vadd.f32 %v796, %v1025
  %v1027 = vpop.f32.mrb[0].mxu0
  %1028 = vmatprep.mubr.f32.mxu0 0.0
  %1029 = vmatmul.mubr.f32.gmra.mrb[0].mxu0 %v841
  %v1030 = vpop.f32.mrb[0].mxu0
  %v1031 = vadd.f32 %v796, %v1030
  %v1032 = vpop.f32.mrb[0].mxu0
  %1033 = vmatprep.mubr.f32.mxu0 0.0
  %1034 = vmatmul.mubr.f32.gmra.mrb[0].mxu0 %v844
  %v1035 = vpop.f32.mrb[0].mxu0
  %v1036 = vadd.f32 %v796, %v1035
  %v1037 = vpop.f32.mrb[0].mxu0
  %1038 = vmatprep.mubr.f32.mxu0 0.0
  %1039 = vmatmul.mubr.f32.gmra.mrb[0].mxu0 %v847
  %v1040 = vpop.f32.mrb[0].mxu0
  %v1041 = vadd.f32 %v796, %v1040
  %v1042 = vpop.f32.mrb[0].mxu0
  %1043 = vmatprep.mubr.f32.mxu0 0.0
  %1044 = vmatmul.mubr.f32.gmra.mrb[0].mxu0 %v850
  %v1045 = vpop.f32.mrb[0].mxu0
  %v1046 = vadd.f32 %v796, %v1045
  %v1047 = vpop.f32.mrb[0].mxu0
  %1048 = vmatprep.mubr.f32.mxu0 0.0
  %1049 = vmatmul.mubr.f32.gmra.mrb[0].mxu0 %v853
  %v1050 = vpop.f32.mrb[0].mxu0
  %v1051 = vadd.f32 %v796, %v1050
  %v1052 = vpop.f32.mrb[0].mxu0
  %1053 = vmatprep.mubr.f32.mxu0 0.0
  %1054 = vmatmul.mubr.f32.gmra.mrb[0].mxu0 %v856
  %v1055 = vpop.f32.mrb[0].mxu0
  %v1056 = vadd.f32 %v796, %v1055
  %v1057 = vpop.f32.mrb[0].mxu0
  %1058 = vmatprep.mubr.f32.mxu0 0.0
  %1059 = vmatmul.mubr.f32.gmra.mrb[0].mxu0 %v859
  %v1060 = vpop.f32.mrb[0].mxu0
  %v1061 = vadd.f32 %v796, %v1060
  %v1062 = vpop.f32.mrb[0].mxu0
  %1063 = vmatprep.mubr.f32.mxu0 0.0
  %1064 = vmatmul.mubr.f32.gmra.mrb[0].mxu0 %v862
  %v1065 = vpop.f32.mrb[0].mxu0
  %v1066 = vadd.f32 %v796, %v1065
  %v1067 = vpop.f32.mrb[0].mxu0
  %1068 = vmatprep.mubr.f32.mxu0 0.0
  %1069 = vmatmul.mubr.f32.gmra.mrb[0].mxu0 %v865
  %v1070 = vpop.f32.mrb[0].mxu0
  %v1071 = vadd.f32 %v796, %v1070
  %v1072 = vpop.f32.mrb[0].mxu0
  %1073 = vmatprep.mubr.f32.mxu0 0.0
  %1074 = vmatmul.mubr.f32.gmra.mrb[0].mxu0 %v868
  %v1075 = vpop.f32.mrb[0].mxu0
  %v1076 = vadd.f32 %v796, %v1075
  %v1077 = vpop.f32.mrb[0].mxu0
  %1078 = vmatprep.mubr.f32.mxu0 0.0
  %1079 = vmatmul.mubr.f32.gmra.mrb[0].mxu0 %v871
  %v1080 = vpop.f32.mrb[0].mxu0
  %v1081 = vadd.f32 %v796, %v1080
  %v1082 = vpop.f32.mrb[0].mxu0
  %1083 = vmatprep.mubr.f32.mxu0 0.0
  %1084 = vmatmul.mubr.f32.gmra.mrb[0].mxu0 %v874
  %v1085 = vpop.f32.mrb[0].mxu0
  %v1086 = vadd.f32 %v796, %v1085
  %v1087 = vpop.f32.mrb[0].mxu0
  %1088 = vmatprep.mubr.f32.mxu0 0.0
  %1089 = vmatmul.mubr.f32.gmra.mrb[0].mxu0 %v877
  %v1090 = vpop.f32.mrb[0].mxu0
  %v1091 = vadd.f32 %v796, %v1090
  %v1092 = vpop.f32.mrb[0].mxu0
  %1093 = vmatprep.mubr.f32.mxu0 0.0
  %1094 = vmatmul.mubr.f32.gmra.mrb[0].mxu0 %v880
  %v1095 = vpop.f32.mrb[0].mxu0
  %v1096 = vadd.f32 %v796, %v1095
  %v1097 = vpop.f32.mrb[0].mxu0
  %1098 = vmatprep.mubr.f32.mxu0 0.0
  %1099 = vmatmul.mubr.f32.gmra.mrb[0].mxu0 %v883
  %v1100 = vpop.f32.mrb[0].mxu0
  %v1101 = vadd.f32 %v796, %v1100
  %v1102 = vpop.f32.mrb[0].mxu0
  %1103 = vmatprep.mubr.f32.mxu0 0.0
  %1104 = vmatmul.mubr.f32.gmra.mrb[0].mxu0 %v886
  %v1105 = vpop.f32.mrb[0].mxu0
  %v1106 = vadd.f32 %v796, %v1105
  %v1107 = vpop.f32.mrb[0].mxu0
  %1108 = vmatprep.mubr.f32.mxu0 0.0
  %1109 = vmatmul.mubr.f32.gmra.mrb[0].mxu0 %v889
  %v1110 = vpop.f32.mrb[0].mxu0
  %v1111 = vadd.f32 %v796, %v1110
  %v1112 = vpop.f32.mrb[0].mxu0
  %1113 = vmatprep.mubr.f32.mxu0 0.0
  %1114 = vmatmul.mubr.f32.gmra.mrb[0].mxu0 %v892
  %v1115 = vpop.f32.mrb[0].mxu0
  %v1116 = vadd.f32 %v796, %v1115
  %v1117 = vpop.f32.mrb[0].mxu0
  %1118 = vdwg.mxu0
  %vm1119 = vcmask 130048
  %1120 = vst.msk [vmem:[%s7] sm:$0xff] %vm1119, %v961
  %1121 = vst.msk [vmem:[%s7 + $0x8] sm:$0xff] %vm1119, %v966
  %1122 = vst.msk [vmem:[%s7 + $0x10] sm:$0xff] %vm1119, %v971
  %1123 = vst.msk [vmem:[%s7 + $0x18] sm:$0xff] %vm1119, %v976
  %1124 = vst.msk [vmem:[%s7 + $0x20] sm:$0xff] %vm1119, %v981
  %1125 = vst.msk [vmem:[%s7 + $0x28] sm:$0xff] %vm1119, %v986
  %1126 = vst.msk [vmem:[%s7 + $0x30] sm:$0xff] %vm1119, %v991
  %1127 = vst.msk [vmem:[%s7 + $0x38] sm:$0xff] %vm1119, %v996
  %1128 = vst.msk [vmem:[%s7 + $0x40] sm:$0xff] %vm1119, %v1001
  %1129 = vst.msk [vmem:[%s7 + $0x48] sm:$0xff] %vm1119, %v1006
  %1130 = vst.msk [vmem:[%s7 + $0x50] sm:$0xff] %vm1119, %v1011
  %1131 = vst.msk [vmem:[%s7 + $0x58] sm:$0xff] %vm1119, %v1016
  %1132 = vst.msk [vmem:[%s7 + $0x60] sm:$0xff] %vm1119, %v1021
  %1133 = vst.msk [vmem:[%s7 + $0x68] sm:$0xff] %vm1119, %v1026
  %1134 = vst.msk [vmem:[%s7 + $0x70] sm:$0xff] %vm1119, %v1031
  %1135 = vst.msk [vmem:[%s7 + $0x78] sm:$0xff] %vm1119, %v1036
  %1136 = vst.msk [vmem:[%s7 + $0x80] sm:$0xff] %vm1119, %v1041
  %1137 = vst.msk [vmem:[%s7 + $0x88] sm:$0xff] %vm1119, %v1046
  %1138 = vst.msk [vmem:[%s7 + $0x90] sm:$0xff] %vm1119, %v1051
  %1139 = vst.msk [vmem:[%s7 + $0x98] sm:$0xff] %vm1119, %v1056
  %1140 = vst.msk [vmem:[%s7 + $0xa0] sm:$0xff] %vm1119, %v1061
  %1141 = vst.msk [vmem:[%s7 + $0xa8] sm:$0xff] %vm1119, %v1066
  %1142 = vst.msk [vmem:[%s7 + $0xb0] sm:$0xff] %vm1119, %v1071
  %1143 = vst.msk [vmem:[%s7 + $0xb8] sm:$0xff] %vm1119, %v1076
  %1144 = vst.msk [vmem:[%s7 + $0xc0] sm:$0xff] %vm1119, %v1081
  %1145 = vst.msk [vmem:[%s7 + $0xc8] sm:$0xff] %vm1119, %v1086
  %1146 = vst.msk [vmem:[%s7 + $0xd0] sm:$0xff] %vm1119, %v1091
  %1147 = vst.msk [vmem:[%s7 + $0xd8] sm:$0xff] %vm1119, %v1096
  %1148 = vst.msk [vmem:[%s7 + $0xe0] sm:$0xff] %vm1119, %v1101
  %1149 = vst.msk [vmem:[%s7 + $0xe8] sm:$0xff] %vm1119, %v1106
  %1150 = vst.msk [vmem:[%s7 + $0xf0] sm:$0xff] %vm1119, %v1111
  %1151 = vst.msk [vmem:[%s7 + $0xf8] sm:$0xff] %vm1119, %v1116
  // Predicated region
  $region30: #{tpu_custom_call.1} parent=0 // pred_check
    _
  $region31: #{tpu_custom_call.1} parent=0 // pred_check_branch
    %1153 = sbr.rel (0) target = $region33
  $region32: #{tpu_custom_call.1} parent=0 // pred_region
    _
  $region33: #{tpu_custom_call.1} parent=0 // pred_fallthru
    _
  // Predicated region
  $region34: #{tpu_custom_call.1} parent=0 // pred_check
    _
  $region35: #{tpu_custom_call.1} parent=0 // pred_check_branch
    %1155 = sbr.rel (0) target = $region37
  $region36: #{tpu_custom_call.1} parent=0 // pred_region
    _
  $region37: #{tpu_custom_call.1} parent=0 // pred_fallthru
    _

// kernel: tpu_custom_call.1
$region0: #{tpu_custom_call.1}
  #allocation0 [shape = 'u32[]', space=smem, size = 0x4, offset = 0x4, fixed_abs, tag = 'smem constant byte address 0x4 - core index']
  #allocation1 [shape = 'u32[144,128]{1,0:T(1,128)}', space=vmem, size = 0x12000, scoped, tag = 'internal scratch']
  %s0 = inlined_call_operand.vmem [shape: f32[256,32], index: 0, kind: input, shape index: {}]
  %s1 = inlined_call_operand.vmem [shape: f32[32,32], index: 1, kind: input, shape index: {}]
  %s2 = inlined_call_operand.vmem [shape: f32[1,32], index: 2, kind: input, shape index: {}]
  %s3 = inlined_call_operand.vmem [shape: f32[32,32], index: 3, kind: input, shape index: {}]
  %s4 = inlined_call_operand.vmem [shape: f32[1,32], index: 4, kind: input, shape index: {}]
  %s5 = inlined_call_operand.vmem [shape: f32[32,16], index: 5, kind: input, shape index: {}]
  %s6 = inlined_call_operand.vmem [shape: f32[1,16], index: 6, kind: input, shape index: {}]
  %s7 = inlined_call_operand.vmem [shape: f32[256,16], index: 7, kind: output, shape index: {}]
  %s8 = sld [smem:[#allocation0]]
  $region38: #{tpu_custom_call.1} parent=0
    _
  %s10 = ssub.s32 1, %s8
  %s11 = scalar_select 0, %s10, %s8
  // Predicated region
  $region2: #{tpu_custom_call.1} parent=0 // pred_check
    _
  $region3: #{tpu_custom_call.1} parent=0 // pred_check_branch
    %13 = sbr.rel (0) target = $region5
  $region4: #{tpu_custom_call.1} parent=0 // pred_region
    _
  $region5: #{tpu_custom_call.1} parent=0 // pred_fallthru
    _
  // Predicated region
  $region6: #{tpu_custom_call.1} parent=0 // pred_check
    _
  $region7: #{tpu_custom_call.1} parent=0 // pred_check_branch
    %15 = sbr.rel (0) target = $region9
  $region8: #{tpu_custom_call.1} parent=0 // pred_region
    _
  $region9: #{tpu_custom_call.1} parent=0 // pred_fallthru
    _
  // Predicated region
  $region10: #{tpu_custom_call.1} parent=0 // pred_check
    _
  $region11: #{tpu_custom_call.1} parent=0 // pred_check_branch
    %17 = sbr.rel (0) target = $region13
  $region12: #{tpu_custom_call.1} parent=0 // pred_region
    _
  $region13: #{tpu_custom_call.1} parent=0 // pred_fallthru
    _
  // Predicated region
  $region14: #{tpu_custom_call.1} parent=0 // pred_check
    _
  $region15: #{tpu_custom_call.1} parent=0 // pred_check_branch
    %19 = sbr.rel (0) target = $region17
  $region16: #{tpu_custom_call.1} parent=0 // pred_region
    _
  $region17: #{tpu_custom_call.1} parent=0 // pred_fallthru
    _
  // Predicated region
  $region18: #{tpu_custom_call.1} parent=0 // pred_check
    _
  $region19: #{tpu_custom_call.1} parent=0 // pred_check_branch
    %21 = sbr.rel (0) target = $region21
  $region20: #{tpu_custom_call.1} parent=0 // pred_region
    _
  $region21: #{tpu_custom_call.1} parent=0 // pred_fallthru
    _
  // Predicated region
  $region22: #{tpu_custom_call.1} parent=0 // pred_check
    _
  $region23: #{tpu_custom_call.1} parent=0 // pred_check_branch
    %23 = sbr.rel (0) target = $region25
  $region24: #{tpu_custom_call.1} parent=0 // pred_region
    _
  $region25: #{tpu_custom_call.1} parent=0 // pred_fallthru
    _
  // Predicated region
  $region26: #{tpu_custom_call.1} parent=0 // pred_check
    _
  $region27: #{tpu_custom_call.1} parent=0 // pred_check_branch
    %25 = sbr.rel (0) target = $region29
  $region28: #{tpu_custom_call.1} parent=0 // pred_region
    _
  $region29: #{tpu_custom_call.1} parent=0 // pred_fallthru
    _
  %v26 = vld [vmem:[%s0] sm:$0xff]
  %v27 = vld [vmem:[%s0 + $0x8] sm:$0xff]
  %v28 = vld [vmem:[%s0 + $0x10] sm:$0xff]
  %v29 = vld [vmem:[%s0 + $0x18] sm:$0xff]
  %v30 = vld [vmem:[%s0 + $0x20] sm:$0xff]
  %v31 = vld [vmem:[%s0 + $0x28] sm:$0xff]
  %v32 = vld [vmem:[%s0 + $0x30] sm:$0xff]
  %v33 = vld [vmem:[%s0 + $0x38] sm:$0xff]
  %v34 = vld [vmem:[%s0 + $0x40] sm:$0xff]
  %v35 = vld [vmem:[%s0 + $0x48] sm:$0xff]
  %v36 = vld [vmem:[%s0 + $0x50] sm:$0xff]
  %v37 = vld [vmem:[%s0 + $0x58] sm:$0xff]
  %v38 = vld [vmem:[%s0 + $0x60] sm:$0xff]
  %v39 = vld [vmem:[%s0 + $0x68] sm:$0xff]
  %v40 = vld [vmem:[%s0 + $0x70] sm:$0xff]
  %v41 = vld [vmem:[%s0 + $0x78] sm:$0xff]
  %v42 = vld [vmem:[%s0 + $0x80] sm:$0xff]
  %v43 = vld [vmem:[%s0 + $0x88] sm:$0xff]
  %v44 = vld [vmem:[%s0 + $0x90] sm:$0xff]
  %v45 = vld [vmem:[%s0 + $0x98] sm:$0xff]
  %v46 = vld [vmem:[%s0 + $0xa0] sm:$0xff]
  %v47 = vld [vmem:[%s0 + $0xa8] sm:$0xff]
  %v48 = vld [vmem:[%s0 + $0xb0] sm:$0xff]
  %v49 = vld [vmem:[%s0 + $0xb8] sm:$0xff]
  %v50 = vld [vmem:[%s0 + $0xc0] sm:$0xff]
  %v51 = vld [vmem:[%s0 + $0xc8] sm:$0xff]
  %v52 = vld [vmem:[%s0 + $0xd0] sm:$0xff]
  %v53 = vld [vmem:[%s0 + $0xd8] sm:$0xff]
  %v54 = vld [vmem:[%s0 + $0xe0] sm:$0xff]
  %v55 = vld [vmem:[%s0 + $0xe8] sm:$0xff]
  %v56 = vld [vmem:[%s0 + $0xf0] sm:$0xff]
  %v57 = vld [vmem:[%s0 + $0xf8] sm:$0xff]
  %v58 = vld [vmem:[%s1] sm:$0xff]
  %v59 = vld [vmem:[%s1 + $0x8] sm:$0xff]
  %v60 = vld [vmem:[%s1 + $0x10] sm:$0xff]
  %v61 = vld [vmem:[%s1 + $0x18] sm:$0xff]
  %v62 = vld [vmem:[%s2] sm:$0x1]
  %v64 = vlaneseq
  %v65 = vshrl.u32 %v64, 7
  %v66 = vsub.s32 0, %v65
  %v67 = vrot.slane %v62, %v66
  %vm69 = vcmask 261120
  %v71 = vsel %vm69, %v26, 0
  %v74 = vsel %vm69, %v27, 0
  %v77 = vsel %vm69, %v28, 0
  %v80 = vsel %vm69, %v29, 0
  %v83 = vsel %vm69, %v30, 0
  %v86 = vsel %vm69, %v31, 0
  %v89 = vsel %vm69, %v32, 0
  %v92 = vsel %vm69, %v33, 0
  %v95 = vsel %vm69, %v34, 0
  %v98 = vsel %vm69, %v35, 0
  %v101 = vsel %vm69, %v36, 0
  %v104 = vsel %vm69, %v37, 0
  %v107 = vsel %vm69, %v38, 0
  %v110 = vsel %vm69, %v39, 0
  %v113 = vsel %vm69, %v40, 0
  %v116 = vsel %vm69, %v41, 0
  %v119 = vsel %vm69, %v42, 0
  %v122 = vsel %vm69, %v43, 0
  %v125 = vsel %vm69, %v44, 0
  %v128 = vsel %vm69, %v45, 0
  %v131 = vsel %vm69, %v46, 0
  %v134 = vsel %vm69, %v47, 0
  %v137 = vsel %vm69, %v48, 0
  %v140 = vsel %vm69, %v49, 0
  %v143 = vsel %vm69, %v50, 0
  %v146 = vsel %vm69, %v51, 0
  %v149 = vsel %vm69, %v52, 0
  %v152 = vsel %vm69, %v53, 0
  %v155 = vsel %vm69, %v54, 0
  %v158 = vsel %vm69, %v55, 0
  %v161 = vsel %vm69, %v56, 0
  %v164 = vsel %vm69, %v57, 0
  %166 = vmatprep.subr.mxu0 0.0
  %167 = vmatpush1.msra.mxu0 %v58
  %168 = vmatprep.subr.mxu0 0.0
  %169 = vmatpush1.msra.mxu0 %v59
  %170 = vmatprep.subr.mxu0 0.0
  %171 = vmatpush1.msra.mxu0 %v60
  %172 = vmatprep.subr.mxu0 0.0
  %173 = vmatpush1.msra.mxu0 %v61
  %174 = vmatprep.subr.mxu0 0.0
  %175 = vmatpush1.msra.mxu0 0.0
  %176 = vmatprep.subr.mxu0 0.0
  %177 = vmatpush1.msra.mxu0 0.0
  %178 = vmatprep.subr.mxu0 0.0
  %179 = vmatpush1.msra.mxu0 0.0
  %180 = vmatprep.subr.mxu0 0.0
  %181 = vmatpush1.msra.mxu0 0.0
  %182 = vmatprep.subr.mxu0 0.0
  %183 = vmatpush1.msra.mxu0 0.0
  %184 = vmatprep.subr.mxu0 0.0
  %185 = vmatpush1.msra.mxu0 0.0
  %186 = vmatprep.subr.mxu0 0.0
  %187 = vmatpush1.msra.mxu0 0.0
  %188 = vmatprep.subr.mxu0 0.0
  %189 = vmatpush1.msra.mxu0 0.0
  %190 = vmatprep.subr.mxu0 0.0
  %191 = vmatpush1.msra.mxu0 0.0
  %192 = vmatprep.subr.mxu0 0.0
  %193 = vmatpush1.msra.mxu0 0.0
  %194 = vmatprep.subr.mxu0 0.0
  %195 = vmatpush1.msra.mxu0 0.0
  %196 = vmatprep.subr.mxu0 0.0
  %197 = vmatpush1.msra.mxu0 0.0
  %198 = vmatprep.subr.mxu0 0.0
  %199 = vmatpush1.msra.mxu0 0.0
  %200 = vmatprep.subr.mxu0 0.0
  %201 = vmatpush1.msra.mxu0 0.0
  %202 = vmatprep.subr.mxu0 0.0
  %203 = vmatpush1.msra.mxu0 0.0
  %204 = vmatprep.subr.mxu0 0.0
  %205 = vmatpush1.msra.mxu0 0.0
  %206 = vmatprep.subr.mxu0 0.0
  %207 = vmatpush1.msra.mxu0 0.0
  %208 = vmatprep.subr.mxu0 0.0
  %209 = vmatpush1.msra.mxu0 0.0
  %210 = vmatprep.subr.mxu0 0.0
  %211 = vmatpush1.msra.mxu0 0.0
  %212 = vmatprep.subr.mxu0 0.0
  %213 = vmatpush1.msra.mxu0 0.0
  %214 = vmatprep.subr.mxu0 0.0
  %215 = vmatpush1.msra.mxu0 0.0
  %216 = vmatprep.subr.mxu0 0.0
  %217 = vmatpush1.msra.mxu0 0.0
  %218 = vmatprep.subr.mxu0 0.0
  %219 = vmatpush1.msra.mxu0 0.0
  %220 = vmatprep.subr.mxu0 0.0
  %221 = vmatpush1.msra.mxu0 0.0
  %222 = vmatprep.subr.mxu0 0.0
  %223 = vmatpush1.msra.mxu0 0.0
  %224 = vmatprep.subr.mxu0 0.0
  %225 = vmatpush1.msra.mxu0 0.0
  %226 = vmatprep.subr.mxu0 0.0
  %227 = vmatpush1.msra.mxu0 0.0
  %228 = vmatprep.subr.mxu0 0.0
  %229 = vmatpush1.msra.mxu0 0.0
  %230 = vmatprep.mubr.f32.mxu0 0.0
  %231 = vmatmul.mubr.f32.gmra.mrb[0].mxu0 %v71
  %v232 = vpop.f32.mrb[0].mxu0
  %v233 = vadd.f32 %v67, %v232
  %v234 = vpop.f32.mrb[0].mxu0
  %235 = vmatprep.mubr.f32.mxu0 0.0
  %236 = vmatmul.mubr.f32.gmra.mrb[0].mxu0 %v74
  %v237 = vpop.f32.mrb[0].mxu0
  %v238 = vadd.f32 %v67, %v237
  %v239 = vpop.f32.mrb[0].mxu0
  %240 = vmatprep.mubr.f32.mxu0 0.0
  %241 = vmatmul.mubr.f32.gmra.mrb[0].mxu0 %v77
  %v242 = vpop.f32.mrb[0].mxu0
  %v243 = vadd.f32 %v67, %v242
  %v244 = vpop.f32.mrb[0].mxu0
  %245 = vmatprep.mubr.f32.mxu0 0.0
  %246 = vmatmul.mubr.f32.gmra.mrb[0].mxu0 %v80
  %v247 = vpop.f32.mrb[0].mxu0
  %v248 = vadd.f32 %v67, %v247
  %v249 = vpop.f32.mrb[0].mxu0
  %250 = vmatprep.mubr.f32.mxu0 0.0
  %251 = vmatmul.mubr.f32.gmra.mrb[0].mxu0 %v83
  %v252 = vpop.f32.mrb[0].mxu0
  %v253 = vadd.f32 %v67, %v252
  %v254 = vpop.f32.mrb[0].mxu0
  %255 = vmatprep.mubr.f32.mxu0 0.0
  %256 = vmatmul.mubr.f32.gmra.mrb[0].mxu0 %v86
  %v257 = vpop.f32.mrb[0].mxu0
  %v258 = vadd.f32 %v67, %v257
  %v259 = vpop.f32.mrb[0].mxu0
  %260 = vmatprep.mubr.f32.mxu0 0.0
  %261 = vmatmul.mubr.f32.gmra.mrb[0].mxu0 %v89
  %v262 = vpop.f32.mrb[0].mxu0
  %v263 = vadd.f32 %v67, %v262
  %v264 = vpop.f32.mrb[0].mxu0
  %265 = vmatprep.mubr.f32.mxu0 0.0
  %266 = vmatmul.mubr.f32.gmra.mrb[0].mxu0 %v92
  %v267 = vpop.f32.mrb[0].mxu0
  %v268 = vadd.f32 %v67, %v267
  %v269 = vpop.f32.mrb[0].mxu0
  %270 = vmatprep.mubr.f32.mxu0 0.0
  %271 = vmatmul.mubr.f32.gmra.mrb[0].mxu0 %v95
  %v272 = vpop.f32.mrb[0].mxu0
  %v273 = vadd.f32 %v67, %v272
  %v274 = vpop.f32.mrb[0].mxu0
  %275 = vmatprep.mubr.f32.mxu0 0.0
  %276 = vmatmul.mubr.f32.gmra.mrb[0].mxu0 %v98
  %v277 = vpop.f32.mrb[0].mxu0
  %v278 = vadd.f32 %v67, %v277
  %v279 = vpop.f32.mrb[0].mxu0
  %280 = vmatprep.mubr.f32.mxu0 0.0
  %281 = vmatmul.mubr.f32.gmra.mrb[0].mxu0 %v101
  %v282 = vpop.f32.mrb[0].mxu0
  %v283 = vadd.f32 %v67, %v282
  %v284 = vpop.f32.mrb[0].mxu0
  %285 = vmatprep.mubr.f32.mxu0 0.0
  %286 = vmatmul.mubr.f32.gmra.mrb[0].mxu0 %v104
  %v287 = vpop.f32.mrb[0].mxu0
  %v288 = vadd.f32 %v67, %v287
  %v289 = vpop.f32.mrb[0].mxu0
  %290 = vmatprep.mubr.f32.mxu0 0.0
  %291 = vmatmul.mubr.f32.gmra.mrb[0].mxu0 %v107
  %v292 = vpop.f32.mrb[0].mxu0
  %v293 = vadd.f32 %v67, %v292
  %v294 = vpop.f32.mrb[0].mxu0
  %295 = vmatprep.mubr.f32.mxu0 0.0
  %296 = vmatmul.mubr.f32.gmra.mrb[0].mxu0 %v110
  %v297 = vpop.f32.mrb[0].mxu0
  %v298 = vadd.f32 %v67, %v297
  %v299 = vpop.f32.mrb[0].mxu0
  %300 = vmatprep.mubr.f32.mxu0 0.0
  %301 = vmatmul.mubr.f32.gmra.mrb[0].mxu0 %v113
  %v302 = vpop.f32.mrb[0].mxu0
  %v303 = vadd.f32 %v67, %v302
  %v304 = vpop.f32.mrb[0].mxu0
  %305 = vmatprep.mubr.f32.mxu0 0.0
  %306 = vmatmul.mubr.f32.gmra.mrb[0].mxu0 %v116
  %v307 = vpop.f32.mrb[0].mxu0
  %v308 = vadd.f32 %v67, %v307
  %v309 = vpop.f32.mrb[0].mxu0
  %310 = vmatprep.mubr.f32.mxu0 0.0
  %311 = vmatmul.mubr.f32.gmra.mrb[0].mxu0 %v119
  %v312 = vpop.f32.mrb[0].mxu0
  %v313 = vadd.f32 %v67, %v312
  %v314 = vpop.f32.mrb[0].mxu0
  %315 = vmatprep.mubr.f32.mxu0 0.0
  %316 = vmatmul.mubr.f32.gmra.mrb[0].mxu0 %v122
  %v317 = vpop.f32.mrb[0].mxu0
  %v318 = vadd.f32 %v67, %v317
  %v319 = vpop.f32.mrb[0].mxu0
  %320 = vmatprep.mubr.f32.mxu0 0.0
  %321 = vmatmul.mubr.f32.gmra.mrb[0].mxu0 %v125
  %v322 = vpop.f32.mrb[0].mxu0
  %v323 = vadd.f32 %v67, %v322
  %v324 = vpop.f32.mrb[0].mxu0
  %325 = vmatprep.mubr.f32.mxu0 0.0
  %326 = vmatmul.mubr.f32.gmra.mrb[0].mxu0 %v128
  %v327 = vpop.f32.mrb[0].mxu0
  %v328 = vadd.f32 %v67, %v327
  %v329 = vpop.f32.mrb[0].mxu0
  %330 = vmatprep.mubr.f32.mxu0 0.0
  %331 = vmatmul.mubr.f32.gmra.mrb[0].mxu0 %v131
  %v332 = vpop.f32.mrb[0].mxu0
  %v333 = vadd.f32 %v67, %v332
  %v334 = vpop.f32.mrb[0].mxu0
  %335 = vmatprep.mubr.f32.mxu0 0.0
  %336 = vmatmul.mubr.f32.gmra.mrb[0].mxu0 %v134
  %v337 = vpop.f32.mrb[0].mxu0
  %v338 = vadd.f32 %v67, %v337
  %v339 = vpop.f32.mrb[0].mxu0
  %340 = vmatprep.mubr.f32.mxu0 0.0
  %341 = vmatmul.mubr.f32.gmra.mrb[0].mxu0 %v137
  %v342 = vpop.f32.mrb[0].mxu0
  %v343 = vadd.f32 %v67, %v342
  %v344 = vpop.f32.mrb[0].mxu0
  %345 = vmatprep.mubr.f32.mxu0 0.0
  %346 = vmatmul.mubr.f32.gmra.mrb[0].mxu0 %v140
  %v347 = vpop.f32.mrb[0].mxu0
  %v348 = vadd.f32 %v67, %v347
  %v349 = vpop.f32.mrb[0].mxu0
  %350 = vmatprep.mubr.f32.mxu0 0.0
  %351 = vmatmul.mubr.f32.gmra.mrb[0].mxu0 %v143
  %v352 = vpop.f32.mrb[0].mxu0
  %v353 = vadd.f32 %v67, %v352
  %v354 = vpop.f32.mrb[0].mxu0
  %355 = vmatprep.mubr.f32.mxu0 0.0
  %356 = vmatmul.mubr.f32.gmra.mrb[0].mxu0 %v146
  %v357 = vpop.f32.mrb[0].mxu0
  %v358 = vadd.f32 %v67, %v357
  %v359 = vpop.f32.mrb[0].mxu0
  %360 = vmatprep.mubr.f32.mxu0 0.0
  %361 = vmatmul.mubr.f32.gmra.mrb[0].mxu0 %v149
  %v362 = vpop.f32.mrb[0].mxu0
  %v363 = vadd.f32 %v67, %v362
  %v364 = vpop.f32.mrb[0].mxu0
  %365 = vmatprep.mubr.f32.mxu0 0.0
  %366 = vmatmul.mubr.f32.gmra.mrb[0].mxu0 %v152
  %v367 = vpop.f32.mrb[0].mxu0
  %v368 = vadd.f32 %v67, %v367
  %v369 = vpop.f32.mrb[0].mxu0
  %370 = vmatprep.mubr.f32.mxu0 0.0
  %371 = vmatmul.mubr.f32.gmra.mrb[0].mxu0 %v155
  %v372 = vpop.f32.mrb[0].mxu0
  %v373 = vadd.f32 %v67, %v372
  %v374 = vpop.f32.mrb[0].mxu0
  %375 = vmatprep.mubr.f32.mxu0 0.0
  %376 = vmatmul.mubr.f32.gmra.mrb[0].mxu0 %v158
  %v377 = vpop.f32.mrb[0].mxu0
  %v378 = vadd.f32 %v67, %v377
  %v379 = vpop.f32.mrb[0].mxu0
  %380 = vmatprep.mubr.f32.mxu0 0.0
  %381 = vmatmul.mubr.f32.gmra.mrb[0].mxu0 %v161
  %v382 = vpop.f32.mrb[0].mxu0
  %v383 = vadd.f32 %v67, %v382
  %v384 = vpop.f32.mrb[0].mxu0
  %385 = vmatprep.mubr.f32.mxu0 0.0
  %386 = vmatmul.mubr.f32.gmra.mrb[0].mxu0 %v164
  %v387 = vpop.f32.mrb[0].mxu0
  %v388 = vadd.f32 %v67, %v387
  %v389 = vpop.f32.mrb[0].mxu0
  %390 = vdwg.mxu0
  %v391 = vmax.f32 %v233, 0.0
  %v392 = vmax.f32 %v238, 0.0
  %v393 = vmax.f32 %v243, 0.0
  %v394 = vmax.f32 %v248, 0.0
  %v395 = vmax.f32 %v253, 0.0
  %v396 = vmax.f32 %v258, 0.0
  %v397 = vmax.f32 %v263, 0.0
  %v398 = vmax.f32 %v268, 0.0
  %v399 = vmax.f32 %v273, 0.0
  %v400 = vmax.f32 %v278, 0.0
  %v401 = vmax.f32 %v283, 0.0
  %v402 = vmax.f32 %v288, 0.0
  %v403 = vmax.f32 %v293, 0.0
  %v404 = vmax.f32 %v298, 0.0
  %v405 = vmax.f32 %v303, 0.0
  %v406 = vmax.f32 %v308, 0.0
  %v407 = vmax.f32 %v313, 0.0
  %v408 = vmax.f32 %v318, 0.0
  %v409 = vmax.f32 %v323, 0.0
  %v410 = vmax.f32 %v328, 0.0
  %v411 = vmax.f32 %v333, 0.0
  %v412 = vmax.f32 %v338, 0.0
  %v413 = vmax.f32 %v343, 0.0
  %v414 = vmax.f32 %v348, 0.0
  %v415 = vmax.f32 %v353, 0.0
  %v416 = vmax.f32 %v358, 0.0
  %v417 = vmax.f32 %v363, 0.0
  %v418 = vmax.f32 %v368, 0.0
  %v419 = vmax.f32 %v373, 0.0
  %v420 = vmax.f32 %v378, 0.0
  %v421 = vmax.f32 %v383, 0.0
  %v422 = vmax.f32 %v388, 0.0
  %v423 = vld [vmem:[%s3] sm:$0xff]
  %v424 = vld [vmem:[%s3 + $0x8] sm:$0xff]
  %v425 = vld [vmem:[%s3 + $0x10] sm:$0xff]
  %v426 = vld [vmem:[%s3 + $0x18] sm:$0xff]
  %v427 = vld [vmem:[%s4] sm:$0x1]
  %v429 = vlaneseq
  %v430 = vshrl.u32 %v429, 7
  %v431 = vsub.s32 0, %v430
  %v432 = vrot.slane %v427, %v431
  %v435 = vsel %vm69, %v391, 0
  %v438 = vsel %vm69, %v392, 0
  %v441 = vsel %vm69, %v393, 0
  %v444 = vsel %vm69, %v394, 0
  %v447 = vsel %vm69, %v395, 0
  %v450 = vsel %vm69, %v396, 0
  %v453 = vsel %vm69, %v397, 0
  %v456 = vsel %vm69, %v398, 0
  %v459 = vsel %vm69, %v399, 0
  %v462 = vsel %vm69, %v400, 0
  %v465 = vsel %vm69, %v401, 0
  %v468 = vsel %vm69, %v402, 0
  %v471 = vsel %vm69, %v403, 0
  %v474 = vsel %vm69, %v404, 0
  %v477 = vsel %vm69, %v405, 0
  %v480 = vsel %vm69, %v406, 0
  %v483 = vsel %vm69, %v407, 0
  %v486 = vsel %vm69, %v408, 0
  %v489 = vsel %vm69, %v409, 0
  %v492 = vsel %vm69, %v410, 0
  %v495 = vsel %vm69, %v411, 0
  %v498 = vsel %vm69, %v412, 0
  %v501 = vsel %vm69, %v413, 0
  %v504 = vsel %vm69, %v414, 0
  %v507 = vsel %vm69, %v415, 0
  %v510 = vsel %vm69, %v416, 0
  %v513 = vsel %vm69, %v417, 0
  %v516 = vsel %vm69, %v418, 0
  %v519 = vsel %vm69, %v419, 0
  %v522 = vsel %vm69, %v420, 0
  %v525 = vsel %vm69, %v421, 0
  %v528 = vsel %vm69, %v422, 0
  %530 = vmatprep.subr.mxu0 0.0
  %531 = vmatpush1.msra.mxu0 %v423
  %532 = vmatprep.subr.mxu0 0.0
  %533 = vmatpush1.msra.mxu0 %v424
  %534 = vmatprep.subr.mxu0 0.0
  %535 = vmatpush1.msra.mxu0 %v425
  %536 = vmatprep.subr.mxu0 0.0
  %537 = vmatpush1.msra.mxu0 %v426
  %538 = vmatprep.subr.mxu0 0.0
  %539 = vmatpush1.msra.mxu0 0.0
  %540 = vmatprep.subr.mxu0 0.0
  %541 = vmatpush1.msra.mxu0 0.0
  %542 = vmatprep.subr.mxu0 0.0
  %543 = vmatpush1.msra.mxu0 0.0
  %544 = vmatprep.subr.mxu0 0.0
  %545 = vmatpush1.msra.mxu0 0.0
  %546 = vmatprep.subr.mxu0 0.0
  %547 = vmatpush1.msra.mxu0 0.0
  %548 = vmatprep.subr.mxu0 0.0
  %549 = vmatpush1.msra.mxu0 0.0
  %550 = vmatprep.subr.mxu0 0.0
  %551 = vmatpush1.msra.mxu0 0.0
  %552 = vmatprep.subr.mxu0 0.0
  %553 = vmatpush1.msra.mxu0 0.0
  %554 = vmatprep.subr.mxu0 0.0
  %555 = vmatpush1.msra.mxu0 0.0
  %556 = vmatprep.subr.mxu0 0.0
  %557 = vmatpush1.msra.mxu0 0.0
  %558 = vmatprep.subr.mxu0 0.0
  %559 = vmatpush1.msra.mxu0 0.0
  %560 = vmatprep.subr.mxu0 0.0
  %561 = vmatpush1.msra.mxu0 0.0
  %562 = vmatprep.subr.mxu0 0.0
  %563 = vmatpush1.msra.mxu0 0.0
  %564 = vmatprep.subr.mxu0 0.0
  %565 = vmatpush1.msra.mxu0 0.0
  %566 = vmatprep.subr.mxu0 0.0
  %567 = vmatpush1.msra.mxu0 0.0
  %568 = vmatprep.subr.mxu0 0.0
  %569 = vmatpush1.msra.mxu0 0.0
  %570 = vmatprep.subr.mxu0 0.0
  %571 = vmatpush1.msra.mxu0 0.0
  %572 = vmatprep.subr.mxu0 0.0
  %573 = vmatpush1.msra.mxu0 0.0
  %574 = vmatprep.subr.mxu0 0.0
  %575 = vmatpush1.msra.mxu0 0.0
  %576 = vmatprep.subr.mxu0 0.0
  %577 = vmatpush1.msra.mxu0 0.0
  %578 = vmatprep.subr.mxu0 0.0
  %579 = vmatpush1.msra.mxu0 0.0
  %580 = vmatprep.subr.mxu0 0.0
  %581 = vmatpush1.msra.mxu0 0.0
  %582 = vmatprep.subr.mxu0 0.0
  %583 = vmatpush1.msra.mxu0 0.0
  %584 = vmatprep.subr.mxu0 0.0
  %585 = vmatpush1.msra.mxu0 0.0
  %586 = vmatprep.subr.mxu0 0.0
  %587 = vmatpush1.msra.mxu0 0.0
  %588 = vmatprep.subr.mxu0 0.0
  %589 = vmatpush1.msra.mxu0 0.0
  %590 = vmatprep.subr.mxu0 0.0
  %591 = vmatpush1.msra.mxu0 0.0
  %592 = vmatprep.subr.mxu0 0.0
  %593 = vmatpush1.msra.mxu0 0.0
  %594 = vmatprep.mubr.f32.mxu0 0.0
  %595 = vmatmul.mubr.f32.gmra.mrb[0].mxu0 %v435
  %v596 = vpop.f32.mrb[0].mxu0
  %v597 = vadd.f32 %v432, %v596
  %v598 = vpop.f32.mrb[0].mxu0
  %599 = vmatprep.mubr.f32.mxu0 0.0
  %600 = vmatmul.mubr.f32.gmra.mrb[0].mxu0 %v438
  %v601 = vpop.f32.mrb[0].mxu0
  %v602 = vadd.f32 %v432, %v601
  %v603 = vpop.f32.mrb[0].mxu0
  %604 = vmatprep.mubr.f32.mxu0 0.0
  %605 = vmatmul.mubr.f32.gmra.mrb[0].mxu0 %v441
  %v606 = vpop.f32.mrb[0].mxu0
  %v607 = vadd.f32 %v432, %v606
  %v608 = vpop.f32.mrb[0].mxu0
  %609 = vmatprep.mubr.f32.mxu0 0.0
  %610 = vmatmul.mubr.f32.gmra.mrb[0].mxu0 %v444
  %v611 = vpop.f32.mrb[0].mxu0
  %v612 = vadd.f32 %v432, %v611
  %v613 = vpop.f32.mrb[0].mxu0
  %614 = vmatprep.mubr.f32.mxu0 0.0
  %615 = vmatmul.mubr.f32.gmra.mrb[0].mxu0 %v447
  %v616 = vpop.f32.mrb[0].mxu0
  %v617 = vadd.f32 %v432, %v616
  %v618 = vpop.f32.mrb[0].mxu0
  %619 = vmatprep.mubr.f32.mxu0 0.0
  %620 = vmatmul.mubr.f32.gmra.mrb[0].mxu0 %v450
  %v621 = vpop.f32.mrb[0].mxu0
  %v622 = vadd.f32 %v432, %v621
  %v623 = vpop.f32.mrb[0].mxu0
  %624 = vmatprep.mubr.f32.mxu0 0.0
  %625 = vmatmul.mubr.f32.gmra.mrb[0].mxu0 %v453
  %v626 = vpop.f32.mrb[0].mxu0
  %v627 = vadd.f32 %v432, %v626
  %v628 = vpop.f32.mrb[0].mxu0
  %629 = vmatprep.mubr.f32.mxu0 0.0
  %630 = vmatmul.mubr.f32.gmra.mrb[0].mxu0 %v456
  %v631 = vpop.f32.mrb[0].mxu0
  %v632 = vadd.f32 %v432, %v631
  %v633 = vpop.f32.mrb[0].mxu0
  %634 = vmatprep.mubr.f32.mxu0 0.0
  %635 = vmatmul.mubr.f32.gmra.mrb[0].mxu0 %v459
  %v636 = vpop.f32.mrb[0].mxu0
  %v637 = vadd.f32 %v432, %v636
  %v638 = vpop.f32.mrb[0].mxu0
  %639 = vmatprep.mubr.f32.mxu0 0.0
  %640 = vmatmul.mubr.f32.gmra.mrb[0].mxu0 %v462
  %v641 = vpop.f32.mrb[0].mxu0
  %v642 = vadd.f32 %v432, %v641
  %v643 = vpop.f32.mrb[0].mxu0
  %644 = vmatprep.mubr.f32.mxu0 0.0
  %645 = vmatmul.mubr.f32.gmra.mrb[0].mxu0 %v465
  %v646 = vpop.f32.mrb[0].mxu0
  %v647 = vadd.f32 %v432, %v646
  %v648 = vpop.f32.mrb[0].mxu0
  %649 = vmatprep.mubr.f32.mxu0 0.0
  %650 = vmatmul.mubr.f32.gmra.mrb[0].mxu0 %v468
  %v651 = vpop.f32.mrb[0].mxu0
  %v652 = vadd.f32 %v432, %v651
  %v653 = vpop.f32.mrb[0].mxu0
  %654 = vmatprep.mubr.f32.mxu0 0.0
  %655 = vmatmul.mubr.f32.gmra.mrb[0].mxu0 %v471
  %v656 = vpop.f32.mrb[0].mxu0
  %v657 = vadd.f32 %v432, %v656
  %v658 = vpop.f32.mrb[0].mxu0
  %659 = vmatprep.mubr.f32.mxu0 0.0
  %660 = vmatmul.mubr.f32.gmra.mrb[0].mxu0 %v474
  %v661 = vpop.f32.mrb[0].mxu0
  %v662 = vadd.f32 %v432, %v661
  %v663 = vpop.f32.mrb[0].mxu0
  %664 = vmatprep.mubr.f32.mxu0 0.0
  %665 = vmatmul.mubr.f32.gmra.mrb[0].mxu0 %v477
  %v666 = vpop.f32.mrb[0].mxu0
  %v667 = vadd.f32 %v432, %v666
  %v668 = vpop.f32.mrb[0].mxu0
  %669 = vmatprep.mubr.f32.mxu0 0.0
  %670 = vmatmul.mubr.f32.gmra.mrb[0].mxu0 %v480
  %v671 = vpop.f32.mrb[0].mxu0
  %v672 = vadd.f32 %v432, %v671
  %v673 = vpop.f32.mrb[0].mxu0
  %674 = vmatprep.mubr.f32.mxu0 0.0
  %675 = vmatmul.mubr.f32.gmra.mrb[0].mxu0 %v483
  %v676 = vpop.f32.mrb[0].mxu0
  %v677 = vadd.f32 %v432, %v676
  %v678 = vpop.f32.mrb[0].mxu0
  %679 = vmatprep.mubr.f32.mxu0 0.0
  %680 = vmatmul.mubr.f32.gmra.mrb[0].mxu0 %v486
  %v681 = vpop.f32.mrb[0].mxu0
  %v682 = vadd.f32 %v432, %v681
  %v683 = vpop.f32.mrb[0].mxu0
  %684 = vmatprep.mubr.f32.mxu0 0.0
  %685 = vmatmul.mubr.f32.gmra.mrb[0].mxu0 %v489
  %v686 = vpop.f32.mrb[0].mxu0
  %v687 = vadd.f32 %v432, %v686
  %v688 = vpop.f32.mrb[0].mxu0
  %689 = vmatprep.mubr.f32.mxu0 0.0
  %690 = vmatmul.mubr.f32.gmra.mrb[0].mxu0 %v492
  %v691 = vpop.f32.mrb[0].mxu0
  %v692 = vadd.f32 %v432, %v691
  %v693 = vpop.f32.mrb[0].mxu0
  %694 = vmatprep.mubr.f32.mxu0 0.0
  %695 = vmatmul.mubr.f32.gmra.mrb[0].mxu0 %v495
  %v696 = vpop.f32.mrb[0].mxu0
  %v697 = vadd.f32 %v432, %v696
  %v698 = vpop.f32.mrb[0].mxu0
  %699 = vmatprep.mubr.f32.mxu0 0.0
  %700 = vmatmul.mubr.f32.gmra.mrb[0].mxu0 %v498
  %v701 = vpop.f32.mrb[0].mxu0
  %v702 = vadd.f32 %v432, %v701
  %v703 = vpop.f32.mrb[0].mxu0
  %704 = vmatprep.mubr.f32.mxu0 0.0
  %705 = vmatmul.mubr.f32.gmra.mrb[0].mxu0 %v501
  %v706 = vpop.f32.mrb[0].mxu0
  %v707 = vadd.f32 %v432, %v706
  %v708 = vpop.f32.mrb[0].mxu0
  %709 = vmatprep.mubr.f32.mxu0 0.0
  %710 = vmatmul.mubr.f32.gmra.mrb[0].mxu0 %v504
  %v711 = vpop.f32.mrb[0].mxu0
  %v712 = vadd.f32 %v432, %v711
  %v713 = vpop.f32.mrb[0].mxu0
  %714 = vmatprep.mubr.f32.mxu0 0.0
  %715 = vmatmul.mubr.f32.gmra.mrb[0].mxu0 %v507
  %v716 = vpop.f32.mrb[0].mxu0
  %v717 = vadd.f32 %v432, %v716
  %v718 = vpop.f32.mrb[0].mxu0
  %719 = vmatprep.mubr.f32.mxu0 0.0
  %720 = vmatmul.mubr.f32.gmra.mrb[0].mxu0 %v510
  %v721 = vpop.f32.mrb[0].mxu0
  %v722 = vadd.f32 %v432, %v721
  %v723 = vpop.f32.mrb[0].mxu0
  %724 = vmatprep.mubr.f32.mxu0 0.0
  %725 = vmatmul.mubr.f32.gmra.mrb[0].mxu0 %v513
  %v726 = vpop.f32.mrb[0].mxu0
  %v727 = vadd.f32 %v432, %v726
  %v728 = vpop.f32.mrb[0].mxu0
  %729 = vmatprep.mubr.f32.mxu0 0.0
  %730 = vmatmul.mubr.f32.gmra.mrb[0].mxu0 %v516
  %v731 = vpop.f32.mrb[0].mxu0
  %v732 = vadd.f32 %v432, %v731
  %v733 = vpop.f32.mrb[0].mxu0
  %734 = vmatprep.mubr.f32.mxu0 0.0
  %735 = vmatmul.mubr.f32.gmra.mrb[0].mxu0 %v519
  %v736 = vpop.f32.mrb[0].mxu0
  %v737 = vadd.f32 %v432, %v736
  %v738 = vpop.f32.mrb[0].mxu0
  %739 = vmatprep.mubr.f32.mxu0 0.0
  %740 = vmatmul.mubr.f32.gmra.mrb[0].mxu0 %v522
  %v741 = vpop.f32.mrb[0].mxu0
  %v742 = vadd.f32 %v432, %v741
  %v743 = vpop.f32.mrb[0].mxu0
  %744 = vmatprep.mubr.f32.mxu0 0.0
  %745 = vmatmul.mubr.f32.gmra.mrb[0].mxu0 %v525
  %v746 = vpop.f32.mrb[0].mxu0
  %v747 = vadd.f32 %v432, %v746
  %v748 = vpop.f32.mrb[0].mxu0
  %749 = vmatprep.mubr.f32.mxu0 0.0
  %750 = vmatmul.mubr.f32.gmra.mrb[0].mxu0 %v528
  %v751 = vpop.f32.mrb[0].mxu0
  %v752 = vadd.f32 %v432, %v751
  %v753 = vpop.f32.mrb[0].mxu0
  %754 = vdwg.mxu0
  %v755 = vmax.f32 %v597, 0.0
  %v756 = vmax.f32 %v602, 0.0
  %v757 = vmax.f32 %v607, 0.0
  %v758 = vmax.f32 %v612, 0.0
  %v759 = vmax.f32 %v617, 0.0
  %v760 = vmax.f32 %v622, 0.0
  %v761 = vmax.f32 %v627, 0.0
  %v762 = vmax.f32 %v632, 0.0
  %v763 = vmax.f32 %v637, 0.0
  %v764 = vmax.f32 %v642, 0.0
  %v765 = vmax.f32 %v647, 0.0
  %v766 = vmax.f32 %v652, 0.0
  %v767 = vmax.f32 %v657, 0.0
  %v768 = vmax.f32 %v662, 0.0
  %v769 = vmax.f32 %v667, 0.0
  %v770 = vmax.f32 %v672, 0.0
  %v771 = vmax.f32 %v677, 0.0
  %v772 = vmax.f32 %v682, 0.0
  %v773 = vmax.f32 %v687, 0.0
  %v774 = vmax.f32 %v692, 0.0
  %v775 = vmax.f32 %v697, 0.0
  %v776 = vmax.f32 %v702, 0.0
  %v777 = vmax.f32 %v707, 0.0
  %v778 = vmax.f32 %v712, 0.0
  %v779 = vmax.f32 %v717, 0.0
  %v780 = vmax.f32 %v722, 0.0
  %v781 = vmax.f32 %v727, 0.0
  %v782 = vmax.f32 %v732, 0.0
  %v783 = vmax.f32 %v737, 0.0
  %v784 = vmax.f32 %v742, 0.0
  %v785 = vmax.f32 %v747, 0.0
  %v786 = vmax.f32 %v752, 0.0
  %v787 = vld [vmem:[%s5] sm:$0xff]
  %v788 = vld [vmem:[%s5 + $0x8] sm:$0xff]
  %v789 = vld [vmem:[%s5 + $0x10] sm:$0xff]
  %v790 = vld [vmem:[%s5 + $0x18] sm:$0xff]
  %v791 = vld [vmem:[%s6] sm:$0x1]
  %v793 = vlaneseq
  %v794 = vshrl.u32 %v793, 7
  %v795 = vsub.s32 0, %v794
  %v796 = vrot.slane %v791, %v795
  %v799 = vsel %vm69, %v755, 0
  %v802 = vsel %vm69, %v756, 0
  %v805 = vsel %vm69, %v757, 0
  %v808 = vsel %vm69, %v758, 0
  %v811 = vsel %vm69, %v759, 0
  %v814 = vsel %vm69, %v760, 0
  %v817 = vsel %vm69, %v761, 0
  %v820 = vsel %vm69, %v762, 0
  %v823 = vsel %vm69, %v763, 0
  %v826 = vsel %vm69, %v764, 0
  %v829 = vsel %vm69, %v765, 0
  %v832 = vsel %vm69, %v766, 0
  %v835 = vsel %vm69, %v767, 0
  %v838 = vsel %vm69, %v768, 0
  %v841 = vsel %vm69, %v769, 0
  %v844 = vsel %vm69, %v770, 0
  %v847 = vsel %vm69, %v771, 0
  %v850 = vsel %vm69, %v772, 0
  %v853 = vsel %vm69, %v773, 0
  %v856 = vsel %vm69, %v774, 0
  %v859 = vsel %vm69, %v775, 0
  %v862 = vsel %vm69, %v776, 0
  %v865 = vsel %vm69, %v777, 0
  %v868 = vsel %vm69, %v778, 0
  %v871 = vsel %vm69, %v779, 0
  %v874 = vsel %vm69, %v780, 0
  %v877 = vsel %vm69, %v781, 0
  %v880 = vsel %vm69, %v782, 0
  %v883 = vsel %vm69, %v783, 0
  %v886 = vsel %vm69, %v784, 0
  %v889 = vsel %vm69, %v785, 0
  %v892 = vsel %vm69, %v786, 0
  %894 = vmatprep.subr.mxu0 0.0
  %895 = vmatpush1.msra.mxu0 %v787
  %896 = vmatprep.subr.mxu0 0.0
  %897 = vmatpush1.msra.mxu0 %v788
  %898 = vmatprep.subr.mxu0 0.0
  %899 = vmatpush1.msra.mxu0 %v789
  %900 = vmatprep.subr.mxu0 0.0
  %901 = vmatpush1.msra.mxu0 %v790
  %902 = vmatprep.subr.mxu0 0.0
  %903 = vmatpush1.msra.mxu0 0.0
  %904 = vmatprep.subr.mxu0 0.0
  %905 = vmatpush1.msra.mxu0 0.0
  %906 = vmatprep.subr.mxu0 0.0
  %907 = vmatpush1.msra.mxu0 0.0
  %908 = vmatprep.subr.mxu0 0.0
  %909 = vmatpush1.msra.mxu0 0.0
  %910 = vmatprep.subr.mxu0 0.0
  %911 = vmatpush1.msra.mxu0 0.0
  %912 = vmatprep.subr.mxu0 0.0
  %913 = vmatpush1.msra.mxu0 0.0
  %914 = vmatprep.subr.mxu0 0.0
  %915 = vmatpush1.msra.mxu0 0.0
  %916 = vmatprep.subr.mxu0 0.0
  %917 = vmatpush1.msra.mxu0 0.0
  %918 = vmatprep.subr.mxu0 0.0
  %919 = vmatpush1.msra.mxu0 0.0
  %920 = vmatprep.subr.mxu0 0.0
  %921 = vmatpush1.msra.mxu0 0.0
  %922 = vmatprep.subr.mxu0 0.0
  %923 = vmatpush1.msra.mxu0 0.0
  %924 = vmatprep.subr.mxu0 0.0
  %925 = vmatpush1.msra.mxu0 0.0
  %926 = vmatprep.subr.mxu0 0.0
  %927 = vmatpush1.msra.mxu0 0.0
  %928 = vmatprep.subr.mxu0 0.0
  %929 = vmatpush1.msra.mxu0 0.0
  %930 = vmatprep.subr.mxu0 0.0
  %931 = vmatpush1.msra.mxu0 0.0
  %932 = vmatprep.subr.mxu0 0.0
  %933 = vmatpush1.msra.mxu0 0.0
  %934 = vmatprep.subr.mxu0 0.0
  %935 = vmatpush1.msra.mxu0 0.0
  %936 = vmatprep.subr.mxu0 0.0
  %937 = vmatpush1.msra.mxu0 0.0
  %938 = vmatprep.subr.mxu0 0.0
  %939 = vmatpush1.msra.mxu0 0.0
  %940 = vmatprep.subr.mxu0 0.0
  %941 = vmatpush1.msra.mxu0 0.0
  %942 = vmatprep.subr.mxu0 0.0
  %943 = vmatpush1.msra.mxu0 0.0
  %944 = vmatprep.subr.mxu0 0.0
  %945 = vmatpush1.msra.mxu0 0.0
  %946 = vmatprep.subr.mxu0 0.0
  %947 = vmatpush1.msra.mxu0 0.0
  %948 = vmatprep.subr.mxu0 0.0
  %949 = vmatpush1.msra.mxu0 0.0
  %950 = vmatprep.subr.mxu0 0.0
  %951 = vmatpush1.msra.mxu0 0.0
  %952 = vmatprep.subr.mxu0 0.0
  %953 = vmatpush1.msra.mxu0 0.0
  %954 = vmatprep.subr.mxu0 0.0
  %955 = vmatpush1.msra.mxu0 0.0
  %956 = vmatprep.subr.mxu0 0.0
  %957 = vmatpush1.msra.mxu0 0.0
  %958 = vmatprep.mubr.f32.mxu0 0.0
  %959 = vmatmul.mubr.f32.gmra.mrb[0].mxu0 %v799
  %v960 = vpop.f32.mrb[0].mxu0
  %v961 = vadd.f32 %v796, %v960
  %v962 = vpop.f32.mrb[0].mxu0
  %963 = vmatprep.mubr.f32.mxu0 0.0
  %964 = vmatmul.mubr.f32.gmra.mrb[0].mxu0 %v802
  %v965 = vpop.f32.mrb[0].mxu0
  %v966 = vadd.f32 %v796, %v965
  %v967 = vpop.f32.mrb[0].mxu0
  %968 = vmatprep.mubr.f32.mxu0 0.0
  %969 = vmatmul.mubr.f32.gmra.mrb[0].mxu0 %v805
  %v970 = vpop.f32.mrb[0].mxu0
  %v971 = vadd.f32 %v796, %v970
  %v972 = vpop.f32.mrb[0].mxu0
  %973 = vmatprep.mubr.f32.mxu0 0.0
  %974 = vmatmul.mubr.f32.gmra.mrb[0].mxu0 %v808
  %v975 = vpop.f32.mrb[0].mxu0
  %v976 = vadd.f32 %v796, %v975
  %v977 = vpop.f32.mrb[0].mxu0
  %978 = vmatprep.mubr.f32.mxu0 0.0
  %979 = vmatmul.mubr.f32.gmra.mrb[0].mxu0 %v811
  %v980 = vpop.f32.mrb[0].mxu0
  %v981 = vadd.f32 %v796, %v980
  %v982 = vpop.f32.mrb[0].mxu0
  %983 = vmatprep.mubr.f32.mxu0 0.0
  %984 = vmatmul.mubr.f32.gmra.mrb[0].mxu0 %v814
  %v985 = vpop.f32.mrb[0].mxu0
  %v986 = vadd.f32 %v796, %v985
  %v987 = vpop.f32.mrb[0].mxu0
  %988 = vmatprep.mubr.f32.mxu0 0.0
  %989 = vmatmul.mubr.f32.gmra.mrb[0].mxu0 %v817
  %v990 = vpop.f32.mrb[0].mxu0
  %v991 = vadd.f32 %v796, %v990
  %v992 = vpop.f32.mrb[0].mxu0
  %993 = vmatprep.mubr.f32.mxu0 0.0
  %994 = vmatmul.mubr.f32.gmra.mrb[0].mxu0 %v820
  %v995 = vpop.f32.mrb[0].mxu0
  %v996 = vadd.f32 %v796, %v995
  %v997 = vpop.f32.mrb[0].mxu0
  %998 = vmatprep.mubr.f32.mxu0 0.0
  %999 = vmatmul.mubr.f32.gmra.mrb[0].mxu0 %v823
  %v1000 = vpop.f32.mrb[0].mxu0
  %v1001 = vadd.f32 %v796, %v1000
  %v1002 = vpop.f32.mrb[0].mxu0
  %1003 = vmatprep.mubr.f32.mxu0 0.0
  %1004 = vmatmul.mubr.f32.gmra.mrb[0].mxu0 %v826
  %v1005 = vpop.f32.mrb[0].mxu0
  %v1006 = vadd.f32 %v796, %v1005
  %v1007 = vpop.f32.mrb[0].mxu0
  %1008 = vmatprep.mubr.f32.mxu0 0.0
  %1009 = vmatmul.mubr.f32.gmra.mrb[0].mxu0 %v829
  %v1010 = vpop.f32.mrb[0].mxu0
  %v1011 = vadd.f32 %v796, %v1010
  %v1012 = vpop.f32.mrb[0].mxu0
  %1013 = vmatprep.mubr.f32.mxu0 0.0
  %1014 = vmatmul.mubr.f32.gmra.mrb[0].mxu0 %v832
  %v1015 = vpop.f32.mrb[0].mxu0
  %v1016 = vadd.f32 %v796, %v1015
  %v1017 = vpop.f32.mrb[0].mxu0
  %1018 = vmatprep.mubr.f32.mxu0 0.0
  %1019 = vmatmul.mubr.f32.gmra.mrb[0].mxu0 %v835
  %v1020 = vpop.f32.mrb[0].mxu0
  %v1021 = vadd.f32 %v796, %v1020
  %v1022 = vpop.f32.mrb[0].mxu0
  %1023 = vmatprep.mubr.f32.mxu0 0.0
  %1024 = vmatmul.mubr.f32.gmra.mrb[0].mxu0 %v838
  %v1025 = vpop.f32.mrb[0].mxu0
  %v1026 = vadd.f32 %v796, %v1025
  %v1027 = vpop.f32.mrb[0].mxu0
  %1028 = vmatprep.mubr.f32.mxu0 0.0
  %1029 = vmatmul.mubr.f32.gmra.mrb[0].mxu0 %v841
  %v1030 = vpop.f32.mrb[0].mxu0
  %v1031 = vadd.f32 %v796, %v1030
  %v1032 = vpop.f32.mrb[0].mxu0
  %1033 = vmatprep.mubr.f32.mxu0 0.0
  %1034 = vmatmul.mubr.f32.gmra.mrb[0].mxu0 %v844
  %v1035 = vpop.f32.mrb[0].mxu0
  %v1036 = vadd.f32 %v796, %v1035
  %v1037 = vpop.f32.mrb[0].mxu0
  %1038 = vmatprep.mubr.f32.mxu0 0.0
  %1039 = vmatmul.mubr.f32.gmra.mrb[0].mxu0 %v847
  %v1040 = vpop.f32.mrb[0].mxu0
  %v1041 = vadd.f32 %v796, %v1040
  %v1042 = vpop.f32.mrb[0].mxu0
  %1043 = vmatprep.mubr.f32.mxu0 0.0
  %1044 = vmatmul.mubr.f32.gmra.mrb[0].mxu0 %v850
  %v1045 = vpop.f32.mrb[0].mxu0
  %v1046 = vadd.f32 %v796, %v1045
  %v1047 = vpop.f32.mrb[0].mxu0
  %1048 = vmatprep.mubr.f32.mxu0 0.0
  %1049 = vmatmul.mubr.f32.gmra.mrb[0].mxu0 %v853
  %v1050 = vpop.f32.mrb[0].mxu0
  %v1051 = vadd.f32 %v796, %v1050
  %v1052 = vpop.f32.mrb[0].mxu0
  %1053 = vmatprep.mubr.f32.mxu0 0.0
  %1054 = vmatmul.mubr.f32.gmra.mrb[0].mxu0 %v856
  %v1055 = vpop.f32.mrb[0].mxu0
  %v1056 = vadd.f32 %v796, %v1055
  %v1057 = vpop.f32.mrb[0].mxu0
  %1058 = vmatprep.mubr.f32.mxu0 0.0
  %1059 = vmatmul.mubr.f32.gmra.mrb[0].mxu0 %v859
  %v1060 = vpop.f32.mrb[0].mxu0
  %v1061 = vadd.f32 %v796, %v1060
  %v1062 = vpop.f32.mrb[0].mxu0
  %1063 = vmatprep.mubr.f32.mxu0 0.0
  %1064 = vmatmul.mubr.f32.gmra.mrb[0].mxu0 %v862
  %v1065 = vpop.f32.mrb[0].mxu0
  %v1066 = vadd.f32 %v796, %v1065
  %v1067 = vpop.f32.mrb[0].mxu0
  %1068 = vmatprep.mubr.f32.mxu0 0.0
  %1069 = vmatmul.mubr.f32.gmra.mrb[0].mxu0 %v865
  %v1070 = vpop.f32.mrb[0].mxu0
  %v1071 = vadd.f32 %v796, %v1070
  %v1072 = vpop.f32.mrb[0].mxu0
  %1073 = vmatprep.mubr.f32.mxu0 0.0
  %1074 = vmatmul.mubr.f32.gmra.mrb[0].mxu0 %v868
  %v1075 = vpop.f32.mrb[0].mxu0
  %v1076 = vadd.f32 %v796, %v1075
  %v1077 = vpop.f32.mrb[0].mxu0
  %1078 = vmatprep.mubr.f32.mxu0 0.0
  %1079 = vmatmul.mubr.f32.gmra.mrb[0].mxu0 %v871
  %v1080 = vpop.f32.mrb[0].mxu0
  %v1081 = vadd.f32 %v796, %v1080
  %v1082 = vpop.f32.mrb[0].mxu0
  %1083 = vmatprep.mubr.f32.mxu0 0.0
  %1084 = vmatmul.mubr.f32.gmra.mrb[0].mxu0 %v874
  %v1085 = vpop.f32.mrb[0].mxu0
  %v1086 = vadd.f32 %v796, %v1085
  %v1087 = vpop.f32.mrb[0].mxu0
  %1088 = vmatprep.mubr.f32.mxu0 0.0
  %1089 = vmatmul.mubr.f32.gmra.mrb[0].mxu0 %v877
  %v1090 = vpop.f32.mrb[0].mxu0
  %v1091 = vadd.f32 %v796, %v1090
  %v1092 = vpop.f32.mrb[0].mxu0
  %1093 = vmatprep.mubr.f32.mxu0 0.0
  %1094 = vmatmul.mubr.f32.gmra.mrb[0].mxu0 %v880
  %v1095 = vpop.f32.mrb[0].mxu0
  %v1096 = vadd.f32 %v796, %v1095
  %v1097 = vpop.f32.mrb[0].mxu0
  %1098 = vmatprep.mubr.f32.mxu0 0.0
  %1099 = vmatmul.mubr.f32.gmra.mrb[0].mxu0 %v883
  %v1100 = vpop.f32.mrb[0].mxu0
  %v1101 = vadd.f32 %v796, %v1100
  %v1102 = vpop.f32.mrb[0].mxu0
  %1103 = vmatprep.mubr.f32.mxu0 0.0
  %1104 = vmatmul.mubr.f32.gmra.mrb[0].mxu0 %v886
  %v1105 = vpop.f32.mrb[0].mxu0
  %v1106 = vadd.f32 %v796, %v1105
  %v1107 = vpop.f32.mrb[0].mxu0
  %1108 = vmatprep.mubr.f32.mxu0 0.0
  %1109 = vmatmul.mubr.f32.gmra.mrb[0].mxu0 %v889
  %v1110 = vpop.f32.mrb[0].mxu0
  %v1111 = vadd.f32 %v796, %v1110
  %v1112 = vpop.f32.mrb[0].mxu0
  %1113 = vmatprep.mubr.f32.mxu0 0.0
  %1114 = vmatmul.mubr.f32.gmra.mrb[0].mxu0 %v892
  %v1115 = vpop.f32.mrb[0].mxu0
  %v1116 = vadd.f32 %v796, %v1115
  %v1117 = vpop.f32.mrb[0].mxu0
  %1118 = vdwg.mxu0
  %vm1119 = vcmask 130048
  %1120 = vst.msk [vmem:[%s7] sm:$0xff] %vm1119, %v961
  %1121 = vst.msk [vmem:[%s7 + $0x8] sm:$0xff] %vm1119, %v966
  %1122 = vst.msk [vmem:[%s7 + $0x10] sm:$0xff] %vm1119, %v971
  %1123 = vst.msk [vmem:[%s7 + $0x18] sm:$0xff] %vm1119, %v976
  %1124 = vst.msk [vmem:[%s7 + $0x20] sm:$0xff] %vm1119, %v981
  %1125 = vst.msk [vmem:[%s7 + $0x28] sm:$0xff] %vm1119, %v986
  %1126 = vst.msk [vmem:[%s7 + $0x30] sm:$0xff] %vm1119, %v991
  %1127 = vst.msk [vmem:[%s7 + $0x38] sm:$0xff] %vm1119, %v996
  %1128 = vst.msk [vmem:[%s7 + $0x40] sm:$0xff] %vm1119, %v1001
  %1129 = vst.msk [vmem:[%s7 + $0x48] sm:$0xff] %vm1119, %v1006
  %1130 = vst.msk [vmem:[%s7 + $0x50] sm:$0xff] %vm1119, %v1011
  %1131 = vst.msk [vmem:[%s7 + $0x58] sm:$0xff] %vm1119, %v1016
  %1132 = vst.msk [vmem:[%s7 + $0x60] sm:$0xff] %vm1119, %v1021
  %1133 = vst.msk [vmem:[%s7 + $0x68] sm:$0xff] %vm1119, %v1026
  %1134 = vst.msk [vmem:[%s7 + $0x70] sm:$0xff] %vm1119, %v1031
  %1135 = vst.msk [vmem:[%s7 + $0x78] sm:$0xff] %vm1119, %v1036
  %1136 = vst.msk [vmem:[%s7 + $0x80] sm:$0xff] %vm1119, %v1041
  %1137 = vst.msk [vmem:[%s7 + $0x88] sm:$0xff] %vm1119, %v1046
  %1138 = vst.msk [vmem:[%s7 + $0x90] sm:$0xff] %vm1119, %v1051
  %1139 = vst.msk [vmem:[%s7 + $0x98] sm:$0xff] %vm1119, %v1056
  %1140 = vst.msk [vmem:[%s7 + $0xa0] sm:$0xff] %vm1119, %v1061
  %1141 = vst.msk [vmem:[%s7 + $0xa8] sm:$0xff] %vm1119, %v1066
  %1142 = vst.msk [vmem:[%s7 + $0xb0] sm:$0xff] %vm1119, %v1071
  %1143 = vst.msk [vmem:[%s7 + $0xb8] sm:$0xff] %vm1119, %v1076
  %1144 = vst.msk [vmem:[%s7 + $0xc0] sm:$0xff] %vm1119, %v1081
  %1145 = vst.msk [vmem:[%s7 + $0xc8] sm:$0xff] %vm1119, %v1086
  %1146 = vst.msk [vmem:[%s7 + $0xd0] sm:$0xff] %vm1119, %v1091
  %1147 = vst.msk [vmem:[%s7 + $0xd8] sm:$0xff] %vm1119, %v1096
  %1148 = vst.msk [vmem:[%s7 + $0xe0] sm:$0xff] %vm1119, %v1101
  %1149 = vst.msk [vmem:[%s7 + $0xe8] sm:$0xff] %vm1119, %v1106
  %1150 = vst.msk [vmem:[%s7 + $0xf0] sm:$0xff] %vm1119, %v1111
  %1151 = vst.msk [vmem:[%s7 + $0xf8] sm:$0xff] %vm1119, %v1116
  // Predicated region
  $region30: #{tpu_custom_call.1} parent=0 // pred_check
    _
  $region31: #{tpu_custom_call.1} parent=0 // pred_check_branch
    %1153 = sbr.rel (0) target = $region33
  $region32: #{tpu_custom_call.1} parent=0 // pred_region
    _
  $region33: #{tpu_custom_call.1} parent=0 // pred_fallthru
    _
  // Predicated region
  $region34: #{tpu_custom_call.1} parent=0 // pred_check
    _
  $region35: #{tpu_custom_call.1} parent=0 // pred_check_branch
    %1155 = sbr.rel (0) target = $region37
  $region36: #{tpu_custom_call.1} parent=0 // pred_region
    _
  $region37: #{tpu_custom_call.1} parent=0 // pred_fallthru
    _

</llo_original>
